<compile_context>
chip_gen: v7x
topology: tpu7x:2x2x1
jax: 0.10.0
libtpu: 0.0.40
codegen_flags: <defaults>
</compile_context>

<pallas_src>
import functools

import jax
import jax.numpy as jnp
from jax import lax
from jax.experimental import pallas as pl
from jax.experimental.pallas import tpu as pltpu


def _gate_activations(gates, c, H):
    """PyTorch LSTM gate math; gate order is (i, f, g, o). gates/c are f32."""
    i = jax.nn.sigmoid(gates[:, 0 * H:1 * H])
    f = jax.nn.sigmoid(gates[:, 1 * H:2 * H])
    g = jnp.tanh(gates[:, 2 * H:3 * H])
    o = jax.nn.sigmoid(gates[:, 3 * H:4 * H])
    c_new = f * c + i * g
    h_new = o * jnp.tanh(c_new)
    return h_new, c_new


def network_kernel(x_ref,                        # (T*B, I)   bf16, time-major, flat
                   wih0_ref, whh0_ref, b0_ref,   # (I,4H) bf16, (H,4H) bf16, (1,4H) f32
                   wih1_ref, whh1_ref, b1_ref,   # (H,4H) bf16, (H,4H) bf16, (1,4H) f32
                   wcls_ref, bcls_ref,           # (H,C) f32, (1,C) f32
                   out_ref,                      # (B, C) f32
                   xp_ref,                       # scratch (T*B, 4H) f32: hoisted proj.
                   hseq_ref,                     # scratch (T*B, H)  f32: layer-0 h seq
                   *, T, B, H):
    f32 = jnp.float32
    bf16 = jnp.bfloat16
    zeros = jnp.zeros((B, H), f32)

    # ---------- layer 0: hoisted input projection (one big MXU matmul) ----------
    xp_ref[...] = (jnp.dot(x_ref[...], wih0_ref[...], preferred_element_type=f32)
                   + b0_ref[...])

    w_hh0 = whh0_ref[...]   # (H, 4H) bf16, lives in vregs across the unrolled loop

    # t == 0: h == 0, so the recurrent matmul vanishes.
    h, c = _gate_activations(xp_ref[pl.ds(0, B), :], zeros, H)
    hseq_ref[pl.ds(0, B), :] = h

    def step0(t, carry):
        h, c = carry
        s = pl.multiple_of(t * B, B)
        gates = xp_ref[pl.ds(s, B), :] + jnp.dot(
            h.astype(bf16), w_hh0, preferred_element_type=f32)
        h_new, c_new = _gate_activations(gates, c, H)
        hseq_ref[pl.ds(s, B), :] = h_new
        return h_new, c_new

    if T > 1:
        lax.fori_loop(1, T, step0, (h, c), unroll=True)

    # ---------- layer 1: hoisted input projection over the whole h0 sequence ----
    xp_ref[...] = (jnp.dot(hseq_ref[...].astype(bf16), wih1_ref[...],
                           preferred_element_type=f32)
                   + b1_ref[...])

    w_hh1 = whh1_ref[...]

    # t == 0 peeled again (h == 0).
    h, c = _gate_activations(xp_ref[pl.ds(0, B), :], zeros, H)

    def step1(t, carry):
        h, c = carry
        s = pl.multiple_of(t * B, B)
        gates = xp_ref[pl.ds(s, B), :] + jnp.dot(
            h.astype(bf16), w_hh1, preferred_element_type=f32)
        return _gate_activations(gates, c, H)

    if T > 1:
        h, c = lax.fori_loop(1, T, step1, (h, c), unroll=True)

    # ---------- classifier + sigmoid on the final hidden state (f32, once) ------
    logits = jnp.dot(h, wcls_ref[...], preferred_element_type=f32) + bcls_ref[...]
    out_ref[...] = jax.nn.sigmoid(logits)


@jax.jit
def network_forward(x, wih0, whh0, b0, wih1, whh1, b1, wcls, bcls):
    """x: (B, T, I) batch_first, float32. Returns (B, C) float32 probabilities."""
    B, T, I = x.shape
    H = whh0.shape[0]
    C = wcls.shape[1]
    bf16 = jnp.bfloat16

    # Pad batch to a full sublane group (8): free inside the kernel, sliced off after.
    B_pad = max(8, -(-B // 8) * 8)
    x_tm = jnp.transpose(x, (1, 0, 2))                               # (T, B, I)
    x_tm = jnp.pad(x_tm, ((0, 0), (0, B_pad - B), (0, 0)))           # (T, B_pad, I)
    x_flat = x_tm.reshape(T * B_pad, I).astype(bf16)                 # time-major flat

    vmem = pl.BlockSpec(memory_space=pltpu.MemorySpace.VMEM)
    kernel = functools.partial(network_kernel, T=T, B=B_pad, H=H)

    out = pl.pallas_call(
        kernel,
        out_shape=jax.ShapeDtypeStruct((B_pad, C), jnp.float32),
        in_specs=[vmem] * 9,
        out_specs=vmem,
        scratch_shapes=[
            pltpu.VMEM((T * B_pad, 4 * H), jnp.float32),   # hoisted gate projections
            pltpu.VMEM((T * B_pad, H), jnp.float32),       # layer-0 hidden sequence
        ],
    )(x_flat,
      wih0.astype(bf16), whh0.astype(bf16), b0,
      wih1.astype(bf16), whh1.astype(bf16), b1,
      wcls, bcls)
    return out[:B]


# ----------------------- pure-JAX f32 reference (for verification) -----------------
def reference_forward(x, wih0, whh0, b0, wih1, whh1, b1, wcls, bcls):
    B, T, _ = x.shape
    H = whh0.shape[0]

    def cell(x_t, h, c, w_ih, w_hh, b):
        gates = x_t @ w_ih + h @ w_hh + b
        return _gate_activations(gates, c, H)

    def run_layer(seq, w_ih, w_hh, b):
        h = jnp.zeros((B, H), jnp.float32)
        c = jnp.zeros((B, H), jnp.float32)
        hs = []
        for t in range(T):
            h, c = cell(seq[:, t, :], h, c, w_ih, w_hh, b)
            hs.append(h)
        return jnp.stack(hs, axis=1), h

    seq0, _ = run_layer(x, wih0, whh0, b0)
    _, h_last = run_layer(seq0, wih1, whh1, b1)
    return jax.nn.sigmoid(h_last @ wcls + bcls)


if __name__ == "__main__":
    # Small config consistent with the module's forward:
    B, T, I, H, C = 2, 8, 16, 32, 4   # batch, seq, input_size, hidden_size, n_classes

    key = jax.random.PRNGKey(0)
    keys = jax.random.split(key, 10)
    bound = 1.0 / jnp.sqrt(H)          # PyTorch LSTM/Linear-style uniform init

    def u(k, shape):
        return jax.random.uniform(k, shape, jnp.float32, -bound, bound)

    x = jax.random.normal(keys[0], (B, T, I), jnp.float32)

    # LSTM weights pre-transposed to (D_in, 4H); biases combine b_ih + b_hh -> (1, 4H)
    wih0 = u(keys[1], (I, 4 * H))
    whh0 = u(keys[2], (H, 4 * H))
    b0 = u(keys[3], (1, 4 * H))
    wih1 = u(keys[4], (H, 4 * H))
    whh1 = u(keys[5], (H, 4 * H))
    b1 = u(keys[6], (1, 4 * H))
    # Classifier: (H, C) and (1, C)
    wcls = u(keys[7], (H, C))
    bcls = u(keys[8], (1, C))

    out = network_forward(x, wih0, whh0, b0, wih1, whh1, b1, wcls, bcls)
    out = jax.block_until_ready(out)

    ref = reference_forward(x, wih0, whh0, b0, wih1, whh1, b1, wcls, bcls)
    assert out.shape == (B, C), out.shape
    assert bool(jnp.all(jnp.isfinite(out)))
    # bf16 matmul operands with f32 accumulation -> loosen tolerance vs f32 reference.
    assert bool(jnp.allclose(out, ref, atol=2e-2, rtol=2e-2)), "mismatch vs reference"

    print("KERNEL_OK")
</pallas_src>

<mosaic_0001>
module attributes {stable_mosaic.version = 11 : i64} {
  func.func @network_kernel(%arg0: memref<64x16xbf16, #tpu.memory_space<vmem>>, %arg1: memref<16x128xbf16, #tpu.memory_space<vmem>>, %arg2: memref<32x128xbf16, #tpu.memory_space<vmem>>, %arg3: memref<1x128xf32, #tpu.memory_space<vmem>>, %arg4: memref<32x128xbf16, #tpu.memory_space<vmem>>, %arg5: memref<32x128xbf16, #tpu.memory_space<vmem>>, %arg6: memref<1x128xf32, #tpu.memory_space<vmem>>, %arg7: memref<32x4xf32, #tpu.memory_space<vmem>>, %arg8: memref<1x4xf32, #tpu.memory_space<vmem>>, %arg9: memref<8x4xf32, #tpu.memory_space<vmem>>, %arg10: memref<64x128xf32, #tpu.memory_space<vmem>>, %arg11: memref<64x32xf32, #tpu.memory_space<vmem>>) attributes {dimension_semantics = [], scalar_prefetch = 0 : i64, scratch_operands = 2 : i64, tpu.core_type = #tpu.core_type<tc>} {
    %cst = arith.constant 0.000000e+00 : f32
    %0 = vector.broadcast %cst : f32 to vector<8x32xf32>
    %c0 = arith.constant 0 : index
    %c0_0 = arith.constant 0 : index
    %1 = vector.load %arg0[%c0, %c0_0] : memref<64x16xbf16, #tpu.memory_space<vmem>>, vector<64x16xbf16>
    %c0_1 = arith.constant 0 : index
    %c0_2 = arith.constant 0 : index
    %2 = vector.load %arg1[%c0_1, %c0_2] : memref<16x128xbf16, #tpu.memory_space<vmem>>, vector<16x128xbf16>
    %cst_3 = arith.constant dense<0.000000e+00> : vector<64x128xf32>
    %3 = tpu.matmul %1, %2, %cst_3 {dimension_numbers = #tpu.dot_dimension_numbers<[1], [0], [0], [1], [0, 0, 1, 1], [], []>} : vector<64x16xbf16>, vector<16x128xbf16>, vector<64x128xf32> -> vector<64x128xf32>
    %c0_4 = arith.constant 0 : index
    %c0_5 = arith.constant 0 : index
    %4 = vector.load %arg3[%c0_4, %c0_5] : memref<1x128xf32, #tpu.memory_space<vmem>>, vector<1x128xf32>
    %5 = vector.broadcast %4 : vector<1x128xf32> to vector<64x128xf32>
    %6 = arith.addf %3, %5 : vector<64x128xf32>
    %c0_6 = arith.constant 0 : index
    %c0_7 = arith.constant 0 : index
    %7 = vector.load %arg10[%c0_6, %c0_7] : memref<64x128xf32, #tpu.memory_space<vmem>>, vector<64x128xf32>
    tpu.vector_store %arg10[%c0_6, %c0_7], %6 {strides = array<i32>} : memref<64x128xf32, #tpu.memory_space<vmem>>, vector<64x128xf32>,
    %c0_8 = arith.constant 0 : index
    %c0_9 = arith.constant 0 : index
    %8 = vector.load %arg2[%c0_8, %c0_9] : memref<32x128xbf16, #tpu.memory_space<vmem>>, vector<32x128xbf16>
    %c0_10 = arith.constant 0 : index
    %c0_11 = arith.constant 0 : index
    %9 = vector.load %arg10[%c0_10, %c0_11] : memref<64x128xf32, #tpu.memory_space<vmem>>, vector<8x128xf32>
    %10 = vector.extract_strided_slice %9 {offsets = [0, 0], sizes = [8, 32], strides = [1, 1]} : vector<8x128xf32> to vector<8x32xf32>
    %11 = arith.negf %10 : vector<8x32xf32>
    %12 = math.exp %11 : vector<8x32xf32>
    %cst_12 = arith.constant 1.000000e+00 : f32
    %13 = vector.broadcast %cst_12 : f32 to vector<8x32xf32>
    %14 = arith.addf %13, %12 : vector<8x32xf32>
    %15 = arith.divf %13, %14 : vector<8x32xf32>
    %16 = vector.extract_strided_slice %9 {offsets = [0, 32], sizes = [8, 32], strides = [1, 1]} : vector<8x128xf32> to vector<8x32xf32>
    %17 = arith.negf %16 : vector<8x32xf32>
    %18 = math.exp %17 : vector<8x32xf32>
    %cst_13 = arith.constant 1.000000e+00 : f32
    %19 = vector.broadcast %cst_13 : f32 to vector<8x32xf32>
    %20 = arith.addf %19, %18 : vector<8x32xf32>
    %21 = arith.divf %19, %20 : vector<8x32xf32>
    %22 = vector.extract_strided_slice %9 {offsets = [0, 64], sizes = [8, 32], strides = [1, 1]} : vector<8x128xf32> to vector<8x32xf32>
    %23 = math.tanh %22 : vector<8x32xf32>
    %24 = vector.extract_strided_slice %9 {offsets = [0, 96], sizes = [8, 32], strides = [1, 1]} : vector<8x128xf32> to vector<8x32xf32>
    %25 = arith.negf %24 : vector<8x32xf32>
    %26 = math.exp %25 : vector<8x32xf32>
    %cst_14 = arith.constant 1.000000e+00 : f32
    %27 = vector.broadcast %cst_14 : f32 to vector<8x32xf32>
    %28 = arith.addf %27, %26 : vector<8x32xf32>
    %29 = arith.divf %27, %28 : vector<8x32xf32>
    %30 = arith.mulf %21, %0 : vector<8x32xf32>
    %31 = arith.mulf %15, %23 : vector<8x32xf32>
    %32 = arith.addf %30, %31 : vector<8x32xf32>
    %33 = math.tanh %32 : vector<8x32xf32>
    %34 = arith.mulf %29, %33 : vector<8x32xf32>
    %c0_15 = arith.constant 0 : index
    %c0_16 = arith.constant 0 : index
    %35 = vector.load %arg11[%c0_15, %c0_16] : memref<64x32xf32, #tpu.memory_space<vmem>>, vector<8x32xf32>
    tpu.vector_store %arg11[%c0_15, %c0_16], %34 {strides = array<i32>} : memref<64x32xf32, #tpu.memory_space<vmem>>, vector<8x32xf32>,
    %c1_i32 = arith.constant 1 : i32
    %c8_i32 = arith.constant 8 : i32
    %36 = arith.muli %c1_i32, %c8_i32 : i32
    %37 = tpu.assume_multiple %36, 8 : i32
    %38 = arith.index_cast %37 : i32 to index
    %c0_17 = arith.constant 0 : index
    %39 = vector.load %arg10[%38, %c0_17] : memref<64x128xf32, #tpu.memory_space<vmem>>, vector<8x128xf32>
    %40 = arith.truncf %34 : vector<8x32xf32> to vector<8x32xbf16>
    %cst_18 = arith.constant dense<0.000000e+00> : vector<8x128xf32>
    %41 = tpu.matmul %40, %8, %cst_18 {dimension_numbers = #tpu.dot_dimension_numbers<[1], [0], [0], [1], [0, 0, 1, 1], [], []>} : vector<8x32xbf16>, vector<32x128xbf16>, vector<8x128xf32> -> vector<8x128xf32>
    %42 = arith.addf %39, %41 : vector<8x128xf32>
    %43 = vector.extract_strided_slice %42 {offsets = [0, 0], sizes = [8, 32], strides = [1, 1]} : vector<8x128xf32> to vector<8x32xf32>
    %44 = arith.negf %43 : vector<8x32xf32>
    %45 = math.exp %44 : vector<8x32xf32>
    %cst_19 = arith.constant 1.000000e+00 : f32
    %46 = vector.broadcast %cst_19 : f32 to vector<8x32xf32>
    %47 = arith.addf %46, %45 : vector<8x32xf32>
    %48 = arith.divf %46, %47 : vector<8x32xf32>
    %49 = vector.extract_strided_slice %42 {offsets = [0, 32], sizes = [8, 32], strides = [1, 1]} : vector<8x128xf32> to vector<8x32xf32>
    %50 = arith.negf %49 : vector<8x32xf32>
    %51 = math.exp %50 : vector<8x32xf32>
    %cst_20 = arith.constant 1.000000e+00 : f32
    %52 = vector.broadcast %cst_20 : f32 to vector<8x32xf32>
    %53 = arith.addf %52, %51 : vector<8x32xf32>
    %54 = arith.divf %52, %53 : vector<8x32xf32>
    %55 = vector.extract_strided_slice %42 {offsets = [0, 64], sizes = [8, 32], strides = [1, 1]} : vector<8x128xf32> to vector<8x32xf32>
    %56 = math.tanh %55 : vector<8x32xf32>
    %57 = vector.extract_strided_slice %42 {offsets = [0, 96], sizes = [8, 32], strides = [1, 1]} : vector<8x128xf32> to vector<8x32xf32>
    %58 = arith.negf %57 : vector<8x32xf32>
    %59 = math.exp %58 : vector<8x32xf32>
    %cst_21 = arith.constant 1.000000e+00 : f32
    %60 = vector.broadcast %cst_21 : f32 to vector<8x32xf32>
    %61 = arith.addf %60, %59 : vector<8x32xf32>
    %62 = arith.divf %60, %61 : vector<8x32xf32>
    %63 = arith.mulf %54, %32 : vector<8x32xf32>
    %64 = arith.mulf %48, %56 : vector<8x32xf32>
    %65 = arith.addf %63, %64 : vector<8x32xf32>
    %66 = math.tanh %65 : vector<8x32xf32>
    %67 = arith.mulf %62, %66 : vector<8x32xf32>
    %68 = arith.index_cast %37 : i32 to index
    %c0_22 = arith.constant 0 : index
    %69 = vector.load %arg11[%68, %c0_22] : memref<64x32xf32, #tpu.memory_space<vmem>>, vector<8x32xf32>
    tpu.vector_store %arg11[%68, %c0_22], %67 {strides = array<i32>} : memref<64x32xf32, #tpu.memory_space<vmem>>, vector<8x32xf32>,
    %c2_i32 = arith.constant 2 : i32
    %c8_i32_23 = arith.constant 8 : i32
    %70 = arith.muli %c2_i32, %c8_i32_23 : i32
    %71 = tpu.assume_multiple %70, 8 : i32
    %72 = arith.index_cast %71 : i32 to index
    %c0_24 = arith.constant 0 : index
    %73 = vector.load %arg10[%72, %c0_24] : memref<64x128xf32, #tpu.memory_space<vmem>>, vector<8x128xf32>
    %74 = arith.truncf %67 : vector<8x32xf32> to vector<8x32xbf16>
    %cst_25 = arith.constant dense<0.000000e+00> : vector<8x128xf32>
    %75 = tpu.matmul %74, %8, %cst_25 {dimension_numbers = #tpu.dot_dimension_numbers<[1], [0], [0], [1], [0, 0, 1, 1], [], []>} : vector<8x32xbf16>, vector<32x128xbf16>, vector<8x128xf32> -> vector<8x128xf32>
    %76 = arith.addf %73, %75 : vector<8x128xf32>
    %77 = vector.extract_strided_slice %76 {offsets = [0, 0], sizes = [8, 32], strides = [1, 1]} : vector<8x128xf32> to vector<8x32xf32>
    %78 = arith.negf %77 : vector<8x32xf32>
    %79 = math.exp %78 : vector<8x32xf32>
    %cst_26 = arith.constant 1.000000e+00 : f32
    %80 = vector.broadcast %cst_26 : f32 to vector<8x32xf32>
    %81 = arith.addf %80, %79 : vector<8x32xf32>
    %82 = arith.divf %80, %81 : vector<8x32xf32>
    %83 = vector.extract_strided_slice %76 {offsets = [0, 32], sizes = [8, 32], strides = [1, 1]} : vector<8x128xf32> to vector<8x32xf32>
    %84 = arith.negf %83 : vector<8x32xf32>
    %85 = math.exp %84 : vector<8x32xf32>
    %cst_27 = arith.constant 1.000000e+00 : f32
    %86 = vector.broadcast %cst_27 : f32 to vector<8x32xf32>
    %87 = arith.addf %86, %85 : vector<8x32xf32>
    %88 = arith.divf %86, %87 : vector<8x32xf32>
    %89 = vector.extract_strided_slice %76 {offsets = [0, 64], sizes = [8, 32], strides = [1, 1]} : vector<8x128xf32> to vector<8x32xf32>
    %90 = math.tanh %89 : vector<8x32xf32>
    %91 = vector.extract_strided_slice %76 {offsets = [0, 96], sizes = [8, 32], strides = [1, 1]} : vector<8x128xf32> to vector<8x32xf32>
    %92 = arith.negf %91 : vector<8x32xf32>
    %93 = math.exp %92 : vector<8x32xf32>
    %cst_28 = arith.constant 1.000000e+00 : f32
    %94 = vector.broadcast %cst_28 : f32 to vector<8x32xf32>
    %95 = arith.addf %94, %93 : vector<8x32xf32>
    %96 = arith.divf %94, %95 : vector<8x32xf32>
    %97 = arith.mulf %88, %65 : vector<8x32xf32>
    %98 = arith.mulf %82, %90 : vector<8x32xf32>
    %99 = arith.addf %97, %98 : vector<8x32xf32>
    %100 = math.tanh %99 : vector<8x32xf32>
    %101 = arith.mulf %96, %100 : vector<8x32xf32>
    %102 = arith.index_cast %71 : i32 to index
    %c0_29 = arith.constant 0 : index
    %103 = vector.load %arg11[%102, %c0_29] : memref<64x32xf32, #tpu.memory_space<vmem>>, vector<8x32xf32>
    tpu.vector_store %arg11[%102, %c0_29], %101 {strides = array<i32>} : memref<64x32xf32, #tpu.memory_space<vmem>>, vector<8x32xf32>,
    %c3_i32 = arith.constant 3 : i32
    %c8_i32_30 = arith.constant 8 : i32
    %104 = arith.muli %c3_i32, %c8_i32_30 : i32
    %105 = tpu.assume_multiple %104, 8 : i32
    %106 = arith.index_cast %105 : i32 to index
    %c0_31 = arith.constant 0 : index
    %107 = vector.load %arg10[%106, %c0_31] : memref<64x128xf32, #tpu.memory_space<vmem>>, vector<8x128xf32>
    %108 = arith.truncf %101 : vector<8x32xf32> to vector<8x32xbf16>
    %cst_32 = arith.constant dense<0.000000e+00> : vector<8x128xf32>
    %109 = tpu.matmul %108, %8, %cst_32 {dimension_numbers = #tpu.dot_dimension_numbers<[1], [0], [0], [1], [0, 0, 1, 1], [], []>} : vector<8x32xbf16>, vector<32x128xbf16>, vector<8x128xf32> -> vector<8x128xf32>
    %110 = arith.addf %107, %109 : vector<8x128xf32>
    %111 = vector.extract_strided_slice %110 {offsets = [0, 0], sizes = [8, 32], strides = [1, 1]} : vector<8x128xf32> to vector<8x32xf32>
    %112 = arith.negf %111 : vector<8x32xf32>
    %113 = math.exp %112 : vector<8x32xf32>
    %cst_33 = arith.constant 1.000000e+00 : f32
    %114 = vector.broadcast %cst_33 : f32 to vector<8x32xf32>
    %115 = arith.addf %114, %113 : vector<8x32xf32>
    %116 = arith.divf %114, %115 : vector<8x32xf32>
    %117 = vector.extract_strided_slice %110 {offsets = [0, 32], sizes = [8, 32], strides = [1, 1]} : vector<8x128xf32> to vector<8x32xf32>
    %118 = arith.negf %117 : vector<8x32xf32>
    %119 = math.exp %118 : vector<8x32xf32>
    %cst_34 = arith.constant 1.000000e+00 : f32
    %120 = vector.broadcast %cst_34 : f32 to vector<8x32xf32>
    %121 = arith.addf %120, %119 : vector<8x32xf32>
    %122 = arith.divf %120, %121 : vector<8x32xf32>
    %123 = vector.extract_strided_slice %110 {offsets = [0, 64], sizes = [8, 32], strides = [1, 1]} : vector<8x128xf32> to vector<8x32xf32>
    %124 = math.tanh %123 : vector<8x32xf32>
    %125 = vector.extract_strided_slice %110 {offsets = [0, 96], sizes = [8, 32], strides = [1, 1]} : vector<8x128xf32> to vector<8x32xf32>
    %126 = arith.negf %125 : vector<8x32xf32>
    %127 = math.exp %126 : vector<8x32xf32>
    %cst_35 = arith.constant 1.000000e+00 : f32
    %128 = vector.broadcast %cst_35 : f32 to vector<8x32xf32>
    %129 = arith.addf %128, %127 : vector<8x32xf32>
    %130 = arith.divf %128, %129 : vector<8x32xf32>
    %131 = arith.mulf %122, %99 : vector<8x32xf32>
    %132 = arith.mulf %116, %124 : vector<8x32xf32>
    %133 = arith.addf %131, %132 : vector<8x32xf32>
    %134 = math.tanh %133 : vector<8x32xf32>
    %135 = arith.mulf %130, %134 : vector<8x32xf32>
    %136 = arith.index_cast %105 : i32 to index
    %c0_36 = arith.constant 0 : index
    %137 = vector.load %arg11[%136, %c0_36] : memref<64x32xf32, #tpu.memory_space<vmem>>, vector<8x32xf32>
    tpu.vector_store %arg11[%136, %c0_36], %135 {strides = array<i32>} : memref<64x32xf32, #tpu.memory_space<vmem>>, vector<8x32xf32>,
    %c4_i32 = arith.constant 4 : i32
    %c8_i32_37 = arith.constant 8 : i32
    %138 = arith.muli %c4_i32, %c8_i32_37 : i32
    %139 = tpu.assume_multiple %138, 8 : i32
    %140 = arith.index_cast %139 : i32 to index
    %c0_38 = arith.constant 0 : index
    %141 = vector.load %arg10[%140, %c0_38] : memref<64x128xf32, #tpu.memory_space<vmem>>, vector<8x128xf32>
    %142 = arith.truncf %135 : vector<8x32xf32> to vector<8x32xbf16>
    %cst_39 = arith.constant dense<0.000000e+00> : vector<8x128xf32>
    %143 = tpu.matmul %142, %8, %cst_39 {dimension_numbers = #tpu.dot_dimension_numbers<[1], [0], [0], [1], [0, 0, 1, 1], [], []>} : vector<8x32xbf16>, vector<32x128xbf16>, vector<8x128xf32> -> vector<8x128xf32>
    %144 = arith.addf %141, %143 : vector<8x128xf32>
    %145 = vector.extract_strided_slice %144 {offsets = [0, 0], sizes = [8, 32], strides = [1, 1]} : vector<8x128xf32> to vector<8x32xf32>
    %146 = arith.negf %145 : vector<8x32xf32>
    %147 = math.exp %146 : vector<8x32xf32>
    %cst_40 = arith.constant 1.000000e+00 : f32
    %148 = vector.broadcast %cst_40 : f32 to vector<8x32xf32>
    %149 = arith.addf %148, %147 : vector<8x32xf32>
    %150 = arith.divf %148, %149 : vector<8x32xf32>
    %151 = vector.extract_strided_slice %144 {offsets = [0, 32], sizes = [8, 32], strides = [1, 1]} : vector<8x128xf32> to vector<8x32xf32>
    %152 = arith.negf %151 : vector<8x32xf32>
    %153 = math.exp %152 : vector<8x32xf32>
    %cst_41 = arith.constant 1.000000e+00 : f32
    %154 = vector.broadcast %cst_41 : f32 to vector<8x32xf32>
    %155 = arith.addf %154, %153 : vector<8x32xf32>
    %156 = arith.divf %154, %155 : vector<8x32xf32>
    %157 = vector.extract_strided_slice %144 {offsets = [0, 64], sizes = [8, 32], strides = [1, 1]} : vector<8x128xf32> to vector<8x32xf32>
    %158 = math.tanh %157 : vector<8x32xf32>
    %159 = vector.extract_strided_slice %144 {offsets = [0, 96], sizes = [8, 32], strides = [1, 1]} : vector<8x128xf32> to vector<8x32xf32>
    %160 = arith.negf %159 : vector<8x32xf32>
    %161 = math.exp %160 : vector<8x32xf32>
    %cst_42 = arith.constant 1.000000e+00 : f32
    %162 = vector.broadcast %cst_42 : f32 to vector<8x32xf32>
    %163 = arith.addf %162, %161 : vector<8x32xf32>
    %164 = arith.divf %162, %163 : vector<8x32xf32>
    %165 = arith.mulf %156, %133 : vector<8x32xf32>
    %166 = arith.mulf %150, %158 : vector<8x32xf32>
    %167 = arith.addf %165, %166 : vector<8x32xf32>
    %168 = math.tanh %167 : vector<8x32xf32>
    %169 = arith.mulf %164, %168 : vector<8x32xf32>
    %170 = arith.index_cast %139 : i32 to index
    %c0_43 = arith.constant 0 : index
    %171 = vector.load %arg11[%170, %c0_43] : memref<64x32xf32, #tpu.memory_space<vmem>>, vector<8x32xf32>
    tpu.vector_store %arg11[%170, %c0_43], %169 {strides = array<i32>} : memref<64x32xf32, #tpu.memory_space<vmem>>, vector<8x32xf32>,
    %c5_i32 = arith.constant 5 : i32
    %c8_i32_44 = arith.constant 8 : i32
    %172 = arith.muli %c5_i32, %c8_i32_44 : i32
    %173 = tpu.assume_multiple %172, 8 : i32
    %174 = arith.index_cast %173 : i32 to index
    %c0_45 = arith.constant 0 : index
    %175 = vector.load %arg10[%174, %c0_45] : memref<64x128xf32, #tpu.memory_space<vmem>>, vector<8x128xf32>
    %176 = arith.truncf %169 : vector<8x32xf32> to vector<8x32xbf16>
    %cst_46 = arith.constant dense<0.000000e+00> : vector<8x128xf32>
    %177 = tpu.matmul %176, %8, %cst_46 {dimension_numbers = #tpu.dot_dimension_numbers<[1], [0], [0], [1], [0, 0, 1, 1], [], []>} : vector<8x32xbf16>, vector<32x128xbf16>, vector<8x128xf32> -> vector<8x128xf32>
    %178 = arith.addf %175, %177 : vector<8x128xf32>
    %179 = vector.extract_strided_slice %178 {offsets = [0, 0], sizes = [8, 32], strides = [1, 1]} : vector<8x128xf32> to vector<8x32xf32>
    %180 = arith.negf %179 : vector<8x32xf32>
    %181 = math.exp %180 : vector<8x32xf32>
    %cst_47 = arith.constant 1.000000e+00 : f32
    %182 = vector.broadcast %cst_47 : f32 to vector<8x32xf32>
    %183 = arith.addf %182, %181 : vector<8x32xf32>
    %184 = arith.divf %182, %183 : vector<8x32xf32>
    %185 = vector.extract_strided_slice %178 {offsets = [0, 32], sizes = [8, 32], strides = [1, 1]} : vector<8x128xf32> to vector<8x32xf32>
    %186 = arith.negf %185 : vector<8x32xf32>
    %187 = math.exp %186 : vector<8x32xf32>
    %cst_48 = arith.constant 1.000000e+00 : f32
    %188 = vector.broadcast %cst_48 : f32 to vector<8x32xf32>
    %189 = arith.addf %188, %187 : vector<8x32xf32>
    %190 = arith.divf %188, %189 : vector<8x32xf32>
    %191 = vector.extract_strided_slice %178 {offsets = [0, 64], sizes = [8, 32], strides = [1, 1]} : vector<8x128xf32> to vector<8x32xf32>
    %192 = math.tanh %191 : vector<8x32xf32>
    %193 = vector.extract_strided_slice %178 {offsets = [0, 96], sizes = [8, 32], strides = [1, 1]} : vector<8x128xf32> to vector<8x32xf32>
    %194 = arith.negf %193 : vector<8x32xf32>
    %195 = math.exp %194 : vector<8x32xf32>
    %cst_49 = arith.constant 1.000000e+00 : f32
    %196 = vector.broadcast %cst_49 : f32 to vector<8x32xf32>
    %197 = arith.addf %196, %195 : vector<8x32xf32>
    %198 = arith.divf %196, %197 : vector<8x32xf32>
    %199 = arith.mulf %190, %167 : vector<8x32xf32>
    %200 = arith.mulf %184, %192 : vector<8x32xf32>
    %201 = arith.addf %199, %200 : vector<8x32xf32>
    %202 = math.tanh %201 : vector<8x32xf32>
    %203 = arith.mulf %198, %202 : vector<8x32xf32>
    %204 = arith.index_cast %173 : i32 to index
    %c0_50 = arith.constant 0 : index
    %205 = vector.load %arg11[%204, %c0_50] : memref<64x32xf32, #tpu.memory_space<vmem>>, vector<8x32xf32>
    tpu.vector_store %arg11[%204, %c0_50], %203 {strides = array<i32>} : memref<64x32xf32, #tpu.memory_space<vmem>>, vector<8x32xf32>,
    %c6_i32 = arith.constant 6 : i32
    %c8_i32_51 = arith.constant 8 : i32
    %206 = arith.muli %c6_i32, %c8_i32_51 : i32
    %207 = tpu.assume_multiple %206, 8 : i32
    %208 = arith.index_cast %207 : i32 to index
    %c0_52 = arith.constant 0 : index
    %209 = vector.load %arg10[%208, %c0_52] : memref<64x128xf32, #tpu.memory_space<vmem>>, vector<8x128xf32>
    %210 = arith.truncf %203 : vector<8x32xf32> to vector<8x32xbf16>
    %cst_53 = arith.constant dense<0.000000e+00> : vector<8x128xf32>
    %211 = tpu.matmul %210, %8, %cst_53 {dimension_numbers = #tpu.dot_dimension_numbers<[1], [0], [0], [1], [0, 0, 1, 1], [], []>} : vector<8x32xbf16>, vector<32x128xbf16>, vector<8x128xf32> -> vector<8x128xf32>
    %212 = arith.addf %209, %211 : vector<8x128xf32>
    %213 = vector.extract_strided_slice %212 {offsets = [0, 0], sizes = [8, 32], strides = [1, 1]} : vector<8x128xf32> to vector<8x32xf32>
    %214 = arith.negf %213 : vector<8x32xf32>
    %215 = math.exp %214 : vector<8x32xf32>
    %cst_54 = arith.constant 1.000000e+00 : f32
    %216 = vector.broadcast %cst_54 : f32 to vector<8x32xf32>
    %217 = arith.addf %216, %215 : vector<8x32xf32>
    %218 = arith.divf %216, %217 : vector<8x32xf32>
    %219 = vector.extract_strided_slice %212 {offsets = [0, 32], sizes = [8, 32], strides = [1, 1]} : vector<8x128xf32> to vector<8x32xf32>
    %220 = arith.negf %219 : vector<8x32xf32>
    %221 = math.exp %220 : vector<8x32xf32>
    %cst_55 = arith.constant 1.000000e+00 : f32
    %222 = vector.broadcast %cst_55 : f32 to vector<8x32xf32>
    %223 = arith.addf %222, %221 : vector<8x32xf32>
    %224 = arith.divf %222, %223 : vector<8x32xf32>
    %225 = vector.extract_strided_slice %212 {offsets = [0, 64], sizes = [8, 32], strides = [1, 1]} : vector<8x128xf32> to vector<8x32xf32>
    %226 = math.tanh %225 : vector<8x32xf32>
    %227 = vector.extract_strided_slice %212 {offsets = [0, 96], sizes = [8, 32], strides = [1, 1]} : vector<8x128xf32> to vector<8x32xf32>
    %228 = arith.negf %227 : vector<8x32xf32>
    %229 = math.exp %228 : vector<8x32xf32>
    %cst_56 = arith.constant 1.000000e+00 : f32
    %230 = vector.broadcast %cst_56 : f32 to vector<8x32xf32>
    %231 = arith.addf %230, %229 : vector<8x32xf32>
    %232 = arith.divf %230, %231 : vector<8x32xf32>
    %233 = arith.mulf %224, %201 : vector<8x32xf32>
    %234 = arith.mulf %218, %226 : vector<8x32xf32>
    %235 = arith.addf %233, %234 : vector<8x32xf32>
    %236 = math.tanh %235 : vector<8x32xf32>
    %237 = arith.mulf %232, %236 : vector<8x32xf32>
    %238 = arith.index_cast %207 : i32 to index
    %c0_57 = arith.constant 0 : index
    %239 = vector.load %arg11[%238, %c0_57] : memref<64x32xf32, #tpu.memory_space<vmem>>, vector<8x32xf32>
    tpu.vector_store %arg11[%238, %c0_57], %237 {strides = array<i32>} : memref<64x32xf32, #tpu.memory_space<vmem>>, vector<8x32xf32>,
    %c7_i32 = arith.constant 7 : i32
    %c8_i32_58 = arith.constant 8 : i32
    %240 = arith.muli %c7_i32, %c8_i32_58 : i32
    %241 = tpu.assume_multiple %240, 8 : i32
    %242 = arith.index_cast %241 : i32 to index
    %c0_59 = arith.constant 0 : index
    %243 = vector.load %arg10[%242, %c0_59] : memref<64x128xf32, #tpu.memory_space<vmem>>, vector<8x128xf32>
    %244 = arith.truncf %237 : vector<8x32xf32> to vector<8x32xbf16>
    %cst_60 = arith.constant dense<0.000000e+00> : vector<8x128xf32>
    %245 = tpu.matmul %244, %8, %cst_60 {dimension_numbers = #tpu.dot_dimension_numbers<[1], [0], [0], [1], [0, 0, 1, 1], [], []>} : vector<8x32xbf16>, vector<32x128xbf16>, vector<8x128xf32> -> vector<8x128xf32>
    %246 = arith.addf %243, %245 : vector<8x128xf32>
    %247 = vector.extract_strided_slice %246 {offsets = [0, 0], sizes = [8, 32], strides = [1, 1]} : vector<8x128xf32> to vector<8x32xf32>
    %248 = arith.negf %247 : vector<8x32xf32>
    %249 = math.exp %248 : vector<8x32xf32>
    %cst_61 = arith.constant 1.000000e+00 : f32
    %250 = vector.broadcast %cst_61 : f32 to vector<8x32xf32>
    %251 = arith.addf %250, %249 : vector<8x32xf32>
    %252 = arith.divf %250, %251 : vector<8x32xf32>
    %253 = vector.extract_strided_slice %246 {offsets = [0, 32], sizes = [8, 32], strides = [1, 1]} : vector<8x128xf32> to vector<8x32xf32>
    %254 = arith.negf %253 : vector<8x32xf32>
    %255 = math.exp %254 : vector<8x32xf32>
    %cst_62 = arith.constant 1.000000e+00 : f32
    %256 = vector.broadcast %cst_62 : f32 to vector<8x32xf32>
    %257 = arith.addf %256, %255 : vector<8x32xf32>
    %258 = arith.divf %256, %257 : vector<8x32xf32>
    %259 = vector.extract_strided_slice %246 {offsets = [0, 64], sizes = [8, 32], strides = [1, 1]} : vector<8x128xf32> to vector<8x32xf32>
    %260 = math.tanh %259 : vector<8x32xf32>
    %261 = vector.extract_strided_slice %246 {offsets = [0, 96], sizes = [8, 32], strides = [1, 1]} : vector<8x128xf32> to vector<8x32xf32>
    %262 = arith.negf %261 : vector<8x32xf32>
    %263 = math.exp %262 : vector<8x32xf32>
    %cst_63 = arith.constant 1.000000e+00 : f32
    %264 = vector.broadcast %cst_63 : f32 to vector<8x32xf32>
    %265 = arith.addf %264, %263 : vector<8x32xf32>
    %266 = arith.divf %264, %265 : vector<8x32xf32>
    %267 = arith.mulf %258, %235 : vector<8x32xf32>
    %268 = arith.mulf %252, %260 : vector<8x32xf32>
    %269 = arith.addf %267, %268 : vector<8x32xf32>
    %270 = math.tanh %269 : vector<8x32xf32>
    %271 = arith.mulf %266, %270 : vector<8x32xf32>
    %272 = arith.index_cast %241 : i32 to index
    %c0_64 = arith.constant 0 : index
    %273 = vector.load %arg11[%272, %c0_64] : memref<64x32xf32, #tpu.memory_space<vmem>>, vector<8x32xf32>
    tpu.vector_store %arg11[%272, %c0_64], %271 {strides = array<i32>} : memref<64x32xf32, #tpu.memory_space<vmem>>, vector<8x32xf32>,
    %c7_i32_65 = arith.constant 7 : i32
    %c0_66 = arith.constant 0 : index
    %c0_67 = arith.constant 0 : index
    %274 = vector.load %arg11[%c0_66, %c0_67] : memref<64x32xf32, #tpu.memory_space<vmem>>, vector<64x32xf32>
    %275 = arith.truncf %274 : vector<64x32xf32> to vector<64x32xbf16>
    %c0_68 = arith.constant 0 : index
    %c0_69 = arith.constant 0 : index
    %276 = vector.load %arg4[%c0_68, %c0_69] : memref<32x128xbf16, #tpu.memory_space<vmem>>, vector<32x128xbf16>
    %cst_70 = arith.constant dense<0.000000e+00> : vector<64x128xf32>
    %277 = tpu.matmul %275, %276, %cst_70 {dimension_numbers = #tpu.dot_dimension_numbers<[1], [0], [0], [1], [0, 0, 1, 1], [], []>} : vector<64x32xbf16>, vector<32x128xbf16>, vector<64x128xf32> -> vector<64x128xf32>
    %c0_71 = arith.constant 0 : index
    %c0_72 = arith.constant 0 : index
    %278 = vector.load %arg6[%c0_71, %c0_72] : memref<1x128xf32, #tpu.memory_space<vmem>>, vector<1x128xf32>
    %279 = vector.broadcast %278 : vector<1x128xf32> to vector<64x128xf32>
    %280 = arith.addf %277, %279 : vector<64x128xf32>
    %c0_73 = arith.constant 0 : index
    %c0_74 = arith.constant 0 : index
    %281 = vector.load %arg10[%c0_73, %c0_74] : memref<64x128xf32, #tpu.memory_space<vmem>>, vector<64x128xf32>
    tpu.vector_store %arg10[%c0_73, %c0_74], %280 {strides = array<i32>} : memref<64x128xf32, #tpu.memory_space<vmem>>, vector<64x128xf32>,
    %c0_75 = arith.constant 0 : index
    %c0_76 = arith.constant 0 : index
    %282 = vector.load %arg5[%c0_75, %c0_76] : memref<32x128xbf16, #tpu.memory_space<vmem>>, vector<32x128xbf16>
    %c0_77 = arith.constant 0 : index
    %c0_78 = arith.constant 0 : index
    %283 = vector.load %arg10[%c0_77, %c0_78] : memref<64x128xf32, #tpu.memory_space<vmem>>, vector<8x128xf32>
    %284 = vector.extract_strided_slice %283 {offsets = [0, 0], sizes = [8, 32], strides = [1, 1]} : vector<8x128xf32> to vector<8x32xf32>
    %285 = arith.negf %284 : vector<8x32xf32>
    %286 = math.exp %285 : vector<8x32xf32>
    %cst_79 = arith.constant 1.000000e+00 : f32
    %287 = vector.broadcast %cst_79 : f32 to vector<8x32xf32>
    %288 = arith.addf %287, %286 : vector<8x32xf32>
    %289 = arith.divf %287, %288 : vector<8x32xf32>
    %290 = vector.extract_strided_slice %283 {offsets = [0, 32], sizes = [8, 32], strides = [1, 1]} : vector<8x128xf32> to vector<8x32xf32>
    %291 = arith.negf %290 : vector<8x32xf32>
    %292 = math.exp %291 : vector<8x32xf32>
    %cst_80 = arith.constant 1.000000e+00 : f32
    %293 = vector.broadcast %cst_80 : f32 to vector<8x32xf32>
    %294 = arith.addf %293, %292 : vector<8x32xf32>
    %295 = arith.divf %293, %294 : vector<8x32xf32>
    %296 = vector.extract_strided_slice %283 {offsets = [0, 64], sizes = [8, 32], strides = [1, 1]} : vector<8x128xf32> to vector<8x32xf32>
    %297 = math.tanh %296 : vector<8x32xf32>
    %298 = vector.extract_strided_slice %283 {offsets = [0, 96], sizes = [8, 32], strides = [1, 1]} : vector<8x128xf32> to vector<8x32xf32>
    %299 = arith.negf %298 : vector<8x32xf32>
    %300 = math.exp %299 : vector<8x32xf32>
    %cst_81 = arith.constant 1.000000e+00 : f32
    %301 = vector.broadcast %cst_81 : f32 to vector<8x32xf32>
    %302 = arith.addf %301, %300 : vector<8x32xf32>
    %303 = arith.divf %301, %302 : vector<8x32xf32>
    %304 = arith.mulf %295, %0 : vector<8x32xf32>
    %305 = arith.mulf %289, %297 : vector<8x32xf32>
    %306 = arith.addf %304, %305 : vector<8x32xf32>
    %307 = math.tanh %306 : vector<8x32xf32>
    %308 = arith.mulf %303, %307 : vector<8x32xf32>
    %c1_i32_82 = arith.constant 1 : i32
    %c8_i32_83 = arith.constant 8 : i32
    %309 = arith.muli %c1_i32_82, %c8_i32_83 : i32
    %310 = tpu.assume_multiple %309, 8 : i32
    %311 = arith.index_cast %310 : i32 to index
    %c0_84 = arith.constant 0 : index
    %312 = vector.load %arg10[%311, %c0_84] : memref<64x128xf32, #tpu.memory_space<vmem>>, vector<8x128xf32>
    %313 = arith.truncf %308 : vector<8x32xf32> to vector<8x32xbf16>
    %cst_85 = arith.constant dense<0.000000e+00> : vector<8x128xf32>
    %314 = tpu.matmul %313, %282, %cst_85 {dimension_numbers = #tpu.dot_dimension_numbers<[1], [0], [0], [1], [0, 0, 1, 1], [], []>} : vector<8x32xbf16>, vector<32x128xbf16>, vector<8x128xf32> -> vector<8x128xf32>
    %315 = arith.addf %312, %314 : vector<8x128xf32>
    %316 = vector.extract_strided_slice %315 {offsets = [0, 0], sizes = [8, 32], strides = [1, 1]} : vector<8x128xf32> to vector<8x32xf32>
    %317 = arith.negf %316 : vector<8x32xf32>
    %318 = math.exp %317 : vector<8x32xf32>
    %cst_86 = arith.constant 1.000000e+00 : f32
    %319 = vector.broadcast %cst_86 : f32 to vector<8x32xf32>
    %320 = arith.addf %319, %318 : vector<8x32xf32>
    %321 = arith.divf %319, %320 : vector<8x32xf32>
    %322 = vector.extract_strided_slice %315 {offsets = [0, 32], sizes = [8, 32], strides = [1, 1]} : vector<8x128xf32> to vector<8x32xf32>
    %323 = arith.negf %322 : vector<8x32xf32>
    %324 = math.exp %323 : vector<8x32xf32>
    %cst_87 = arith.constant 1.000000e+00 : f32
    %325 = vector.broadcast %cst_87 : f32 to vector<8x32xf32>
    %326 = arith.addf %325, %324 : vector<8x32xf32>
    %327 = arith.divf %325, %326 : vector<8x32xf32>
    %328 = vector.extract_strided_slice %315 {offsets = [0, 64], sizes = [8, 32], strides = [1, 1]} : vector<8x128xf32> to vector<8x32xf32>
    %329 = math.tanh %328 : vector<8x32xf32>
    %330 = vector.extract_strided_slice %315 {offsets = [0, 96], sizes = [8, 32], strides = [1, 1]} : vector<8x128xf32> to vector<8x32xf32>
    %331 = arith.negf %330 : vector<8x32xf32>
    %332 = math.exp %331 : vector<8x32xf32>
    %cst_88 = arith.constant 1.000000e+00 : f32
    %333 = vector.broadcast %cst_88 : f32 to vector<8x32xf32>
    %334 = arith.addf %333, %332 : vector<8x32xf32>
    %335 = arith.divf %333, %334 : vector<8x32xf32>
    %336 = arith.mulf %327, %306 : vector<8x32xf32>
    %337 = arith.mulf %321, %329 : vector<8x32xf32>
    %338 = arith.addf %336, %337 : vector<8x32xf32>
    %339 = math.tanh %338 : vector<8x32xf32>
    %340 = arith.mulf %335, %339 : vector<8x32xf32>
    %c2_i32_89 = arith.constant 2 : i32
    %c8_i32_90 = arith.constant 8 : i32
    %341 = arith.muli %c2_i32_89, %c8_i32_90 : i32
    %342 = tpu.assume_multiple %341, 8 : i32
    %343 = arith.index_cast %342 : i32 to index
    %c0_91 = arith.constant 0 : index
    %344 = vector.load %arg10[%343, %c0_91] : memref<64x128xf32, #tpu.memory_space<vmem>>, vector<8x128xf32>
    %345 = arith.truncf %340 : vector<8x32xf32> to vector<8x32xbf16>
    %cst_92 = arith.constant dense<0.000000e+00> : vector<8x128xf32>
    %346 = tpu.matmul %345, %282, %cst_92 {dimension_numbers = #tpu.dot_dimension_numbers<[1], [0], [0], [1], [0, 0, 1, 1], [], []>} : vector<8x32xbf16>, vector<32x128xbf16>, vector<8x128xf32> -> vector<8x128xf32>
    %347 = arith.addf %344, %346 : vector<8x128xf32>
    %348 = vector.extract_strided_slice %347 {offsets = [0, 0], sizes = [8, 32], strides = [1, 1]} : vector<8x128xf32> to vector<8x32xf32>
    %349 = arith.negf %348 : vector<8x32xf32>
    %350 = math.exp %349 : vector<8x32xf32>
    %cst_93 = arith.constant 1.000000e+00 : f32
    %351 = vector.broadcast %cst_93 : f32 to vector<8x32xf32>
    %352 = arith.addf %351, %350 : vector<8x32xf32>
    %353 = arith.divf %351, %352 : vector<8x32xf32>
    %354 = vector.extract_strided_slice %347 {offsets = [0, 32], sizes = [8, 32], strides = [1, 1]} : vector<8x128xf32> to vector<8x32xf32>
    %355 = arith.negf %354 : vector<8x32xf32>
    %356 = math.exp %355 : vector<8x32xf32>
    %cst_94 = arith.constant 1.000000e+00 : f32
    %357 = vector.broadcast %cst_94 : f32 to vector<8x32xf32>
    %358 = arith.addf %357, %356 : vector<8x32xf32>
    %359 = arith.divf %357, %358 : vector<8x32xf32>
    %360 = vector.extract_strided_slice %347 {offsets = [0, 64], sizes = [8, 32], strides = [1, 1]} : vector<8x128xf32> to vector<8x32xf32>
    %361 = math.tanh %360 : vector<8x32xf32>
    %362 = vector.extract_strided_slice %347 {offsets = [0, 96], sizes = [8, 32], strides = [1, 1]} : vector<8x128xf32> to vector<8x32xf32>
    %363 = arith.negf %362 : vector<8x32xf32>
    %364 = math.exp %363 : vector<8x32xf32>
    %cst_95 = arith.constant 1.000000e+00 : f32
    %365 = vector.broadcast %cst_95 : f32 to vector<8x32xf32>
    %366 = arith.addf %365, %364 : vector<8x32xf32>
    %367 = arith.divf %365, %366 : vector<8x32xf32>
    %368 = arith.mulf %359, %338 : vector<8x32xf32>
    %369 = arith.mulf %353, %361 : vector<8x32xf32>
    %370 = arith.addf %368, %369 : vector<8x32xf32>
    %371 = math.tanh %370 : vector<8x32xf32>
    %372 = arith.mulf %367, %371 : vector<8x32xf32>
    %c3_i32_96 = arith.constant 3 : i32
    %c8_i32_97 = arith.constant 8 : i32
    %373 = arith.muli %c3_i32_96, %c8_i32_97 : i32
    %374 = tpu.assume_multiple %373, 8 : i32
    %375 = arith.index_cast %374 : i32 to index
    %c0_98 = arith.constant 0 : index
    %376 = vector.load %arg10[%375, %c0_98] : memref<64x128xf32, #tpu.memory_space<vmem>>, vector<8x128xf32>
    %377 = arith.truncf %372 : vector<8x32xf32> to vector<8x32xbf16>
    %cst_99 = arith.constant dense<0.000000e+00> : vector<8x128xf32>
    %378 = tpu.matmul %377, %282, %cst_99 {dimension_numbers = #tpu.dot_dimension_numbers<[1], [0], [0], [1], [0, 0, 1, 1], [], []>} : vector<8x32xbf16>, vector<32x128xbf16>, vector<8x128xf32> -> vector<8x128xf32>
    %379 = arith.addf %376, %378 : vector<8x128xf32>
    %380 = vector.extract_strided_slice %379 {offsets = [0, 0], sizes = [8, 32], strides = [1, 1]} : vector<8x128xf32> to vector<8x32xf32>
    %381 = arith.negf %380 : vector<8x32xf32>
    %382 = math.exp %381 : vector<8x32xf32>
    %cst_100 = arith.constant 1.000000e+00 : f32
    %383 = vector.broadcast %cst_100 : f32 to vector<8x32xf32>
    %384 = arith.addf %383, %382 : vector<8x32xf32>
    %385 = arith.divf %383, %384 : vector<8x32xf32>
    %386 = vector.extract_strided_slice %379 {offsets = [0, 32], sizes = [8, 32], strides = [1, 1]} : vector<8x128xf32> to vector<8x32xf32>
    %387 = arith.negf %386 : vector<8x32xf32>
    %388 = math.exp %387 : vector<8x32xf32>
    %cst_101 = arith.constant 1.000000e+00 : f32
    %389 = vector.broadcast %cst_101 : f32 to vector<8x32xf32>
    %390 = arith.addf %389, %388 : vector<8x32xf32>
    %391 = arith.divf %389, %390 : vector<8x32xf32>
    %392 = vector.extract_strided_slice %379 {offsets = [0, 64], sizes = [8, 32], strides = [1, 1]} : vector<8x128xf32> to vector<8x32xf32>
    %393 = math.tanh %392 : vector<8x32xf32>
    %394 = vector.extract_strided_slice %379 {offsets = [0, 96], sizes = [8, 32], strides = [1, 1]} : vector<8x128xf32> to vector<8x32xf32>
    %395 = arith.negf %394 : vector<8x32xf32>
    %396 = math.exp %395 : vector<8x32xf32>
    %cst_102 = arith.constant 1.000000e+00 : f32
    %397 = vector.broadcast %cst_102 : f32 to vector<8x32xf32>
    %398 = arith.addf %397, %396 : vector<8x32xf32>
    %399 = arith.divf %397, %398 : vector<8x32xf32>
    %400 = arith.mulf %391, %370 : vector<8x32xf32>
    %401 = arith.mulf %385, %393 : vector<8x32xf32>
    %402 = arith.addf %400, %401 : vector<8x32xf32>
    %403 = math.tanh %402 : vector<8x32xf32>
    %404 = arith.mulf %399, %403 : vector<8x32xf32>
    %c4_i32_103 = arith.constant 4 : i32
    %c8_i32_104 = arith.constant 8 : i32
    %405 = arith.muli %c4_i32_103, %c8_i32_104 : i32
    %406 = tpu.assume_multiple %405, 8 : i32
    %407 = arith.index_cast %406 : i32 to index
    %c0_105 = arith.constant 0 : index
    %408 = vector.load %arg10[%407, %c0_105] : memref<64x128xf32, #tpu.memory_space<vmem>>, vector<8x128xf32>
    %409 = arith.truncf %404 : vector<8x32xf32> to vector<8x32xbf16>
    %cst_106 = arith.constant dense<0.000000e+00> : vector<8x128xf32>
    %410 = tpu.matmul %409, %282, %cst_106 {dimension_numbers = #tpu.dot_dimension_numbers<[1], [0], [0], [1], [0, 0, 1, 1], [], []>} : vector<8x32xbf16>, vector<32x128xbf16>, vector<8x128xf32> -> vector<8x128xf32>
    %411 = arith.addf %408, %410 : vector<8x128xf32>
    %412 = vector.extract_strided_slice %411 {offsets = [0, 0], sizes = [8, 32], strides = [1, 1]} : vector<8x128xf32> to vector<8x32xf32>
    %413 = arith.negf %412 : vector<8x32xf32>
    %414 = math.exp %413 : vector<8x32xf32>
    %cst_107 = arith.constant 1.000000e+00 : f32
    %415 = vector.broadcast %cst_107 : f32 to vector<8x32xf32>
    %416 = arith.addf %415, %414 : vector<8x32xf32>
    %417 = arith.divf %415, %416 : vector<8x32xf32>
    %418 = vector.extract_strided_slice %411 {offsets = [0, 32], sizes = [8, 32], strides = [1, 1]} : vector<8x128xf32> to vector<8x32xf32>
    %419 = arith.negf %418 : vector<8x32xf32>
    %420 = math.exp %419 : vector<8x32xf32>
    %cst_108 = arith.constant 1.000000e+00 : f32
    %421 = vector.broadcast %cst_108 : f32 to vector<8x32xf32>
    %422 = arith.addf %421, %420 : vector<8x32xf32>
    %423 = arith.divf %421, %422 : vector<8x32xf32>
    %424 = vector.extract_strided_slice %411 {offsets = [0, 64], sizes = [8, 32], strides = [1, 1]} : vector<8x128xf32> to vector<8x32xf32>
    %425 = math.tanh %424 : vector<8x32xf32>
    %426 = vector.extract_strided_slice %411 {offsets = [0, 96], sizes = [8, 32], strides = [1, 1]} : vector<8x128xf32> to vector<8x32xf32>
    %427 = arith.negf %426 : vector<8x32xf32>
    %428 = math.exp %427 : vector<8x32xf32>
    %cst_109 = arith.constant 1.000000e+00 : f32
    %429 = vector.broadcast %cst_109 : f32 to vector<8x32xf32>
    %430 = arith.addf %429, %428 : vector<8x32xf32>
    %431 = arith.divf %429, %430 : vector<8x32xf32>
    %432 = arith.mulf %423, %402 : vector<8x32xf32>
    %433 = arith.mulf %417, %425 : vector<8x32xf32>
    %434 = arith.addf %432, %433 : vector<8x32xf32>
    %435 = math.tanh %434 : vector<8x32xf32>
    %436 = arith.mulf %431, %435 : vector<8x32xf32>
    %c5_i32_110 = arith.constant 5 : i32
    %c8_i32_111 = arith.constant 8 : i32
    %437 = arith.muli %c5_i32_110, %c8_i32_111 : i32
    %438 = tpu.assume_multiple %437, 8 : i32
    %439 = arith.index_cast %438 : i32 to index
    %c0_112 = arith.constant 0 : index
    %440 = vector.load %arg10[%439, %c0_112] : memref<64x128xf32, #tpu.memory_space<vmem>>, vector<8x128xf32>
    %441 = arith.truncf %436 : vector<8x32xf32> to vector<8x32xbf16>
    %cst_113 = arith.constant dense<0.000000e+00> : vector<8x128xf32>
    %442 = tpu.matmul %441, %282, %cst_113 {dimension_numbers = #tpu.dot_dimension_numbers<[1], [0], [0], [1], [0, 0, 1, 1], [], []>} : vector<8x32xbf16>, vector<32x128xbf16>, vector<8x128xf32> -> vector<8x128xf32>
    %443 = arith.addf %440, %442 : vector<8x128xf32>
    %444 = vector.extract_strided_slice %443 {offsets = [0, 0], sizes = [8, 32], strides = [1, 1]} : vector<8x128xf32> to vector<8x32xf32>
    %445 = arith.negf %444 : vector<8x32xf32>
    %446 = math.exp %445 : vector<8x32xf32>
    %cst_114 = arith.constant 1.000000e+00 : f32
    %447 = vector.broadcast %cst_114 : f32 to vector<8x32xf32>
    %448 = arith.addf %447, %446 : vector<8x32xf32>
    %449 = arith.divf %447, %448 : vector<8x32xf32>
    %450 = vector.extract_strided_slice %443 {offsets = [0, 32], sizes = [8, 32], strides = [1, 1]} : vector<8x128xf32> to vector<8x32xf32>
    %451 = arith.negf %450 : vector<8x32xf32>
    %452 = math.exp %451 : vector<8x32xf32>
    %cst_115 = arith.constant 1.000000e+00 : f32
    %453 = vector.broadcast %cst_115 : f32 to vector<8x32xf32>
    %454 = arith.addf %453, %452 : vector<8x32xf32>
    %455 = arith.divf %453, %454 : vector<8x32xf32>
    %456 = vector.extract_strided_slice %443 {offsets = [0, 64], sizes = [8, 32], strides = [1, 1]} : vector<8x128xf32> to vector<8x32xf32>
    %457 = math.tanh %456 : vector<8x32xf32>
    %458 = vector.extract_strided_slice %443 {offsets = [0, 96], sizes = [8, 32], strides = [1, 1]} : vector<8x128xf32> to vector<8x32xf32>
    %459 = arith.negf %458 : vector<8x32xf32>
    %460 = math.exp %459 : vector<8x32xf32>
    %cst_116 = arith.constant 1.000000e+00 : f32
    %461 = vector.broadcast %cst_116 : f32 to vector<8x32xf32>
    %462 = arith.addf %461, %460 : vector<8x32xf32>
    %463 = arith.divf %461, %462 : vector<8x32xf32>
    %464 = arith.mulf %455, %434 : vector<8x32xf32>
    %465 = arith.mulf %449, %457 : vector<8x32xf32>
    %466 = arith.addf %464, %465 : vector<8x32xf32>
    %467 = math.tanh %466 : vector<8x32xf32>
    %468 = arith.mulf %463, %467 : vector<8x32xf32>
    %c6_i32_117 = arith.constant 6 : i32
    %c8_i32_118 = arith.constant 8 : i32
    %469 = arith.muli %c6_i32_117, %c8_i32_118 : i32
    %470 = tpu.assume_multiple %469, 8 : i32
    %471 = arith.index_cast %470 : i32 to index
    %c0_119 = arith.constant 0 : index
    %472 = vector.load %arg10[%471, %c0_119] : memref<64x128xf32, #tpu.memory_space<vmem>>, vector<8x128xf32>
    %473 = arith.truncf %468 : vector<8x32xf32> to vector<8x32xbf16>
    %cst_120 = arith.constant dense<0.000000e+00> : vector<8x128xf32>
    %474 = tpu.matmul %473, %282, %cst_120 {dimension_numbers = #tpu.dot_dimension_numbers<[1], [0], [0], [1], [0, 0, 1, 1], [], []>} : vector<8x32xbf16>, vector<32x128xbf16>, vector<8x128xf32> -> vector<8x128xf32>
    %475 = arith.addf %472, %474 : vector<8x128xf32>
    %476 = vector.extract_strided_slice %475 {offsets = [0, 0], sizes = [8, 32], strides = [1, 1]} : vector<8x128xf32> to vector<8x32xf32>
    %477 = arith.negf %476 : vector<8x32xf32>
    %478 = math.exp %477 : vector<8x32xf32>
    %cst_121 = arith.constant 1.000000e+00 : f32
    %479 = vector.broadcast %cst_121 : f32 to vector<8x32xf32>
    %480 = arith.addf %479, %478 : vector<8x32xf32>
    %481 = arith.divf %479, %480 : vector<8x32xf32>
    %482 = vector.extract_strided_slice %475 {offsets = [0, 32], sizes = [8, 32], strides = [1, 1]} : vector<8x128xf32> to vector<8x32xf32>
    %483 = arith.negf %482 : vector<8x32xf32>
    %484 = math.exp %483 : vector<8x32xf32>
    %cst_122 = arith.constant 1.000000e+00 : f32
    %485 = vector.broadcast %cst_122 : f32 to vector<8x32xf32>
    %486 = arith.addf %485, %484 : vector<8x32xf32>
    %487 = arith.divf %485, %486 : vector<8x32xf32>
    %488 = vector.extract_strided_slice %475 {offsets = [0, 64], sizes = [8, 32], strides = [1, 1]} : vector<8x128xf32> to vector<8x32xf32>
    %489 = math.tanh %488 : vector<8x32xf32>
    %490 = vector.extract_strided_slice %475 {offsets = [0, 96], sizes = [8, 32], strides = [1, 1]} : vector<8x128xf32> to vector<8x32xf32>
    %491 = arith.negf %490 : vector<8x32xf32>
    %492 = math.exp %491 : vector<8x32xf32>
    %cst_123 = arith.constant 1.000000e+00 : f32
    %493 = vector.broadcast %cst_123 : f32 to vector<8x32xf32>
    %494 = arith.addf %493, %492 : vector<8x32xf32>
    %495 = arith.divf %493, %494 : vector<8x32xf32>
    %496 = arith.mulf %487, %466 : vector<8x32xf32>
    %497 = arith.mulf %481, %489 : vector<8x32xf32>
    %498 = arith.addf %496, %497 : vector<8x32xf32>
    %499 = math.tanh %498 : vector<8x32xf32>
    %500 = arith.mulf %495, %499 : vector<8x32xf32>
    %c7_i32_124 = arith.constant 7 : i32
    %c8_i32_125 = arith.constant 8 : i32
    %501 = arith.muli %c7_i32_124, %c8_i32_125 : i32
    %502 = tpu.assume_multiple %501, 8 : i32
    %503 = arith.index_cast %502 : i32 to index
    %c0_126 = arith.constant 0 : index
    %504 = vector.load %arg10[%503, %c0_126] : memref<64x128xf32, #tpu.memory_space<vmem>>, vector<8x128xf32>
    %505 = arith.truncf %500 : vector<8x32xf32> to vector<8x32xbf16>
    %cst_127 = arith.constant dense<0.000000e+00> : vector<8x128xf32>
    %506 = tpu.matmul %505, %282, %cst_127 {dimension_numbers = #tpu.dot_dimension_numbers<[1], [0], [0], [1], [0, 0, 1, 1], [], []>} : vector<8x32xbf16>, vector<32x128xbf16>, vector<8x128xf32> -> vector<8x128xf32>
    %507 = arith.addf %504, %506 : vector<8x128xf32>
    %508 = vector.extract_strided_slice %507 {offsets = [0, 0], sizes = [8, 32], strides = [1, 1]} : vector<8x128xf32> to vector<8x32xf32>
    %509 = arith.negf %508 : vector<8x32xf32>
    %510 = math.exp %509 : vector<8x32xf32>
    %cst_128 = arith.constant 1.000000e+00 : f32
    %511 = vector.broadcast %cst_128 : f32 to vector<8x32xf32>
    %512 = arith.addf %511, %510 : vector<8x32xf32>
    %513 = arith.divf %511, %512 : vector<8x32xf32>
    %514 = vector.extract_strided_slice %507 {offsets = [0, 32], sizes = [8, 32], strides = [1, 1]} : vector<8x128xf32> to vector<8x32xf32>
    %515 = arith.negf %514 : vector<8x32xf32>
    %516 = math.exp %515 : vector<8x32xf32>
    %cst_129 = arith.constant 1.000000e+00 : f32
    %517 = vector.broadcast %cst_129 : f32 to vector<8x32xf32>
    %518 = arith.addf %517, %516 : vector<8x32xf32>
    %519 = arith.divf %517, %518 : vector<8x32xf32>
    %520 = vector.extract_strided_slice %507 {offsets = [0, 64], sizes = [8, 32], strides = [1, 1]} : vector<8x128xf32> to vector<8x32xf32>
    %521 = math.tanh %520 : vector<8x32xf32>
    %522 = vector.extract_strided_slice %507 {offsets = [0, 96], sizes = [8, 32], strides = [1, 1]} : vector<8x128xf32> to vector<8x32xf32>
    %523 = arith.negf %522 : vector<8x32xf32>
    %524 = math.exp %523 : vector<8x32xf32>
    %cst_130 = arith.constant 1.000000e+00 : f32
    %525 = vector.broadcast %cst_130 : f32 to vector<8x32xf32>
    %526 = arith.addf %525, %524 : vector<8x32xf32>
    %527 = arith.divf %525, %526 : vector<8x32xf32>
    %528 = arith.mulf %519, %498 : vector<8x32xf32>
    %529 = arith.mulf %513, %521 : vector<8x32xf32>
    %530 = arith.addf %528, %529 : vector<8x32xf32>
    %531 = math.tanh %530 : vector<8x32xf32>
    %532 = arith.mulf %527, %531 : vector<8x32xf32>
    %c7_i32_131 = arith.constant 7 : i32
    %c0_132 = arith.constant 0 : index
    %c0_133 = arith.constant 0 : index
    %533 = vector.load %arg7[%c0_132, %c0_133] : memref<32x4xf32, #tpu.memory_space<vmem>>, vector<32x4xf32>
    %cst_134 = arith.constant dense<0.000000e+00> : vector<8x4xf32>
    %534 = tpu.matmul %532, %533, %cst_134 {dimension_numbers = #tpu.dot_dimension_numbers<[1], [0], [0], [1], [0, 0, 1, 1], [], []>} : vector<8x32xf32>, vector<32x4xf32>, vector<8x4xf32> -> vector<8x4xf32>
    %c0_135 = arith.constant 0 : index
    %c0_136 = arith.constant 0 : index
    %535 = vector.load %arg8[%c0_135, %c0_136] : memref<1x4xf32, #tpu.memory_space<vmem>>, vector<1x4xf32>
    %536 = vector.broadcast %535 : vector<1x4xf32> to vector<8x4xf32>
    %537 = arith.addf %534, %536 : vector<8x4xf32>
    %538 = arith.negf %537 : vector<8x4xf32>
    %539 = math.exp %538 : vector<8x4xf32>
    %cst_137 = arith.constant 1.000000e+00 : f32
    %540 = vector.broadcast %cst_137 : f32 to vector<8x4xf32>
    %541 = arith.addf %540, %539 : vector<8x4xf32>
    %542 = arith.divf %540, %541 : vector<8x4xf32>
    %c0_138 = arith.constant 0 : index
    %c0_139 = arith.constant 0 : index
    %543 = vector.load %arg9[%c0_138, %c0_139] : memref<8x4xf32, #tpu.memory_space<vmem>>, vector<8x4xf32>
    tpu.vector_store %arg9[%c0_138, %c0_139], %542 {strides = array<i32>} : memref<8x4xf32, #tpu.memory_space<vmem>>, vector<8x4xf32>,
    return
  }
}

</mosaic_0001>

<llo_original>
// kernel: network_forward.1
$region0: #{network_forward.1}
  #allocation0 [shape = 'u32[]', space=smem, size = 0x4, offset = 0x4, fixed_abs, tag = 'smem constant byte address 0x4 - core index']
  #allocation1 [shape = 'u32[144,128]{1,0:T(1,128)}', space=vmem, size = 0x12000, scoped, tag = 'internal scratch']
  #allocation2 [shape = 'f32[64,128]{1,0:T(8,128)}', space=vmem, size = 0x8000, scoped, tag = 'scratch operand']
  #allocation3 [shape = 'f32[64,32]{1,0:T(8,128)}', space=vmem, size = 0x8000, scoped, tag = 'scratch operand']
  %s0 = inlined_call_operand.vmem [shape: bf16[64,16], index: 0, kind: input, shape index: {}]
  %s1 = inlined_call_operand.vmem [shape: bf16[16,128], index: 1, kind: input, shape index: {}]
  %s2 = inlined_call_operand.vmem [shape: bf16[32,128], index: 2, kind: input, shape index: {}]
  %s3 = inlined_call_operand.vmem [shape: f32[1,128], index: 3, kind: input, shape index: {}]
  %s4 = inlined_call_operand.vmem [shape: bf16[32,128], index: 4, kind: input, shape index: {}]
  %s5 = inlined_call_operand.vmem [shape: bf16[32,128], index: 5, kind: input, shape index: {}]
  %s6 = inlined_call_operand.vmem [shape: f32[1,128], index: 6, kind: input, shape index: {}]
  %s7 = inlined_call_operand.vmem [shape: f32[32,4], index: 7, kind: input, shape index: {}]
  %s8 = inlined_call_operand.vmem [shape: f32[1,4], index: 8, kind: input, shape index: {}]
  %s9 = inlined_call_operand.vmem [shape: f32[8,4], index: 9, kind: output, shape index: {}]
  %s10 = sld [smem:[#allocation0]]
  $region46: #{network_forward.1} parent=0
    _
  %s12 = ssub.s32 1, %s10
  %s13 = scalar_select 0, %s12, %s10
  // Predicated region
  $region2: #{network_forward.1} parent=0 // pred_check
    _
  $region3: #{network_forward.1} parent=0 // pred_check_branch
    %15 = sbr.rel (0) target = $region5
  $region4: #{network_forward.1} parent=0 // pred_region
    _
  $region5: #{network_forward.1} parent=0 // pred_fallthru
    _
  // Predicated region
  $region6: #{network_forward.1} parent=0 // pred_check
    _
  $region7: #{network_forward.1} parent=0 // pred_check_branch
    %17 = sbr.rel (0) target = $region9
  $region8: #{network_forward.1} parent=0 // pred_region
    _
  $region9: #{network_forward.1} parent=0 // pred_fallthru
    _
  // Predicated region
  $region10: #{network_forward.1} parent=0 // pred_check
    _
  $region11: #{network_forward.1} parent=0 // pred_check_branch
    %19 = sbr.rel (0) target = $region13
  $region12: #{network_forward.1} parent=0 // pred_region
    _
  $region13: #{network_forward.1} parent=0 // pred_fallthru
    _
  // Predicated region
  $region14: #{network_forward.1} parent=0 // pred_check
    _
  $region15: #{network_forward.1} parent=0 // pred_check_branch
    %21 = sbr.rel (0) target = $region17
  $region16: #{network_forward.1} parent=0 // pred_region
    _
  $region17: #{network_forward.1} parent=0 // pred_fallthru
    _
  // Predicated region
  $region18: #{network_forward.1} parent=0 // pred_check
    _
  $region19: #{network_forward.1} parent=0 // pred_check_branch
    %23 = sbr.rel (0) target = $region21
  $region20: #{network_forward.1} parent=0 // pred_region
    _
  $region21: #{network_forward.1} parent=0 // pred_fallthru
    _
  // Predicated region
  $region22: #{network_forward.1} parent=0 // pred_check
    _
  $region23: #{network_forward.1} parent=0 // pred_check_branch
    %25 = sbr.rel (0) target = $region25
  $region24: #{network_forward.1} parent=0 // pred_region
    _
  $region25: #{network_forward.1} parent=0 // pred_fallthru
    _
  // Predicated region
  $region26: #{network_forward.1} parent=0 // pred_check
    _
  $region27: #{network_forward.1} parent=0 // pred_check_branch
    %27 = sbr.rel (0) target = $region29
  $region28: #{network_forward.1} parent=0 // pred_region
    _
  $region29: #{network_forward.1} parent=0 // pred_fallthru
    _
  // Predicated region
  $region30: #{network_forward.1} parent=0 // pred_check
    _
  $region31: #{network_forward.1} parent=0 // pred_check_branch
    %29 = sbr.rel (0) target = $region33
  $region32: #{network_forward.1} parent=0 // pred_region
    _
  $region33: #{network_forward.1} parent=0 // pred_fallthru
    _
  // Predicated region
  $region34: #{network_forward.1} parent=0 // pred_check
    _
  $region35: #{network_forward.1} parent=0 // pred_check_branch
    %31 = sbr.rel (0) target = $region37
  $region36: #{network_forward.1} parent=0 // pred_region
    _
  $region37: #{network_forward.1} parent=0 // pred_fallthru
    _
  %v33 = vld [vmem:[%s0] sm:$0xf]
  %v34 = vld [vmem:[%s0 + $0x4] sm:$0xf]
  %v35 = vld [vmem:[%s0 + $0x8] sm:$0xf]
  %v36 = vld [vmem:[%s0 + $0xc] sm:$0xf]
  %v37 = vld [vmem:[%s0 + $0x10] sm:$0xf]
  %v38 = vld [vmem:[%s0 + $0x14] sm:$0xf]
  %v39 = vld [vmem:[%s0 + $0x18] sm:$0xf]
  %v40 = vld [vmem:[%s0 + $0x1c] sm:$0xf]
  %v41 = vld [vmem:[%s1] sm:$0xf]
  %v42 = vld [vmem:[%s1 + $0x4] sm:$0xf]
  %v43 = vld [vmem:[%s3] sm:$0x1]
  %v45 = vlaneseq
  %v46 = vshrl.u32 %v45, 7
  %v47 = vsub.s32 0, %v46
  %v48 = vrot.slane %v43, %v47
  %v58 = vunpack.c.l.b16 %v33
  %v59 = vunpack.c.l.b16 %v34
  %v60 = vunpack.c.l.b16 %v35
  %v61 = vunpack.c.l.b16 %v36
  %v62 = vunpack.c.l.b16 %v37
  %v63 = vunpack.c.l.b16 %v38
  %v64 = vunpack.c.l.b16 %v39
  %v65 = vunpack.c.l.b16 %v40
  %v66 = vpack.c.b16 %v59, %v58
  %v67 = vpack.c.b16 %v61, %v60
  %v68 = vpack.c.b16 %v63, %v62
  %v69 = vpack.c.b16 %v65, %v64
  %v72 = vunpack.c.l.b16 %v41
  %v73 = vunpack.c.l.b16 %v42
  %v74 = vpack.c.b16 %v73, %v72
  %vm76 = vcmask 130048
  %v78 = vsel %vm76, %v66, 0
  %v81 = vsel %vm76, %v67, 0
  %v84 = vsel %vm76, %v68, 0
  %v87 = vsel %vm76, %v69, 0
  %89 = vmatprep.subr.bf16.mxu0 0
  %90 = vmatpush1.bf16.msra.mxu0 %v74
  %91 = vmatprep.subr.bf16.mxu0 0
  %92 = vmatpush1.bf16.msra.mxu0 0
  %93 = vmatprep.subr.bf16.mxu0 0
  %94 = vmatpush1.bf16.msra.mxu0 0
  %95 = vmatprep.subr.bf16.mxu0 0
  %96 = vmatpush1.bf16.msra.mxu0 0
  %97 = vmatprep.subr.bf16.mxu0 0
  %98 = vmatpush1.bf16.msra.mxu0 0
  %99 = vmatprep.subr.bf16.mxu0 0
  %100 = vmatpush1.bf16.msra.mxu0 0
  %101 = vmatprep.subr.bf16.mxu0 0
  %102 = vmatpush1.bf16.msra.mxu0 0
  %103 = vmatprep.subr.bf16.mxu0 0
  %104 = vmatpush1.bf16.msra.mxu0 0
  %105 = vmatprep.subr.bf16.mxu0 0
  %106 = vmatpush1.bf16.msra.mxu0 0
  %107 = vmatprep.subr.bf16.mxu0 0
  %108 = vmatpush1.bf16.msra.mxu0 0
  %109 = vmatprep.subr.bf16.mxu0 0
  %110 = vmatpush1.bf16.msra.mxu0 0
  %111 = vmatprep.subr.bf16.mxu0 0
  %112 = vmatpush1.bf16.msra.mxu0 0
  %113 = vmatprep.subr.bf16.mxu0 0
  %114 = vmatpush1.bf16.msra.mxu0 0
  %115 = vmatprep.subr.bf16.mxu0 0
  %116 = vmatpush1.bf16.msra.mxu0 0
  %117 = vmatprep.subr.bf16.mxu0 0
  %118 = vmatpush1.bf16.msra.mxu0 0
  %119 = vmatprep.subr.bf16.mxu0 0
  %120 = vmatpush1.bf16.msra.mxu0 0
  %121 = vmatprep.mubr.bf16.mxu0 0
  %122 = vmatmul.mubr.bf16.gmra.mrb[0].mxu0 %v78
  %v123 = vpop.f32.mrb[0].mxu0
  %v124 = vadd.f32 %v48, %v123
  %v125 = vpop.f32.mrb[0].mxu0
  %v126 = vpop.f32.mrb[0].mxu0
  %v127 = vadd.f32 %v48, %v126
  %v128 = vpop.f32.mrb[0].mxu0
  %129 = vmatprep.mubr.bf16.mxu0 0
  %130 = vmatmul.mubr.bf16.gmra.mrb[0].mxu0 %v81
  %v131 = vpop.f32.mrb[0].mxu0
  %v132 = vadd.f32 %v48, %v131
  %v133 = vpop.f32.mrb[0].mxu0
  %v134 = vpop.f32.mrb[0].mxu0
  %v135 = vadd.f32 %v48, %v134
  %v136 = vpop.f32.mrb[0].mxu0
  %137 = vmatprep.mubr.bf16.mxu0 0
  %138 = vmatmul.mubr.bf16.gmra.mrb[0].mxu0 %v84
  %v139 = vpop.f32.mrb[0].mxu0
  %v140 = vadd.f32 %v48, %v139
  %v141 = vpop.f32.mrb[0].mxu0
  %v142 = vpop.f32.mrb[0].mxu0
  %v143 = vadd.f32 %v48, %v142
  %v144 = vpop.f32.mrb[0].mxu0
  %145 = vmatprep.mubr.bf16.mxu0 0
  %146 = vmatmul.mubr.bf16.gmra.mrb[0].mxu0 %v87
  %v147 = vpop.f32.mrb[0].mxu0
  %v148 = vadd.f32 %v48, %v147
  %v149 = vpop.f32.mrb[0].mxu0
  %v150 = vpop.f32.mrb[0].mxu0
  %v151 = vadd.f32 %v48, %v150
  %v152 = vpop.f32.mrb[0].mxu0
  %153 = vdwg.mxu0
  %154 = vst [vmem:[#allocation2] sm:$0xff] %v124
  %155 = vst [vmem:[#allocation2 + $0x8] sm:$0xff] %v127
  %156 = vst [vmem:[#allocation2 + $0x10] sm:$0xff] %v132
  %157 = vst [vmem:[#allocation2 + $0x18] sm:$0xff] %v135
  %158 = vst [vmem:[#allocation2 + $0x20] sm:$0xff] %v140
  %159 = vst [vmem:[#allocation2 + $0x28] sm:$0xff] %v143
  %160 = vst [vmem:[#allocation2 + $0x30] sm:$0xff] %v148
  %161 = vst [vmem:[#allocation2 + $0x38] sm:$0xff] %v151
  %v162 = vld [vmem:[%s2] sm:$0xf]
  %v163 = vld [vmem:[%s2 + $0x4] sm:$0xf]
  %v164 = vld [vmem:[%s2 + $0x8] sm:$0xf]
  %v165 = vld [vmem:[%s2 + $0xc] sm:$0xf]
  %v166 = vld [vmem:[#allocation2] sm:$0xff]
  %v167 = vxor.u32 %v166, 2147483648
  %v168 = vmul.f32 %v167, 1.442695
  %v169 = vpow.pop %v168
  %v170 = vadd.f32 %v169, 1.0
  %v171 = vrcp.pop %v170
  %v172 = vmul.f32 1.0, %v171
  %v173 = vtanh.pop %v166
  %v174 = vmul.f32 %v172, 0.0
  %176 = vrot.lane.b32.xlu0 %v173, 64
  %v177 = vpop.permute.xlu0 %176
  %v179 = vmul.f32 %v172, %v177
  %181 = vrot.lane.b32.xlu0 %v179, 32
  %v182 = vpop.permute.xlu0 %181
  %v184 = vadd.f32 %v174, %v182
  %v185 = vtanh.pop %v184
  %187 = vrot.lane.b32.xlu0 %v185, 64
  %v188 = vpop.permute.xlu0 %187
  %v190 = vmul.f32 %v172, %v188
  %192 = vrot.lane.b32.xlu0 %v190, 32
  %v193 = vpop.permute.xlu0 %192
  %vm195 = vcmask 261120
  %196 = vst.msk [vmem:[#allocation3] sm:$0xff] %vm195, %v193
  %s197 = scalar_lea.vmem [#allocation2], 8
  %v198 = vld [vmem:[%s197] sm:$0xff]
  %v199 = vpack.c.bf16 %v190, %v190
  %201 = vrot.lane.b32.xlu0 %v199, 32
  %v202 = vpop.permute.xlu0 %201
  %v207 = vunpack.c.l.b16 %v162
  %v208 = vunpack.c.l.b16 %v163
  %v209 = vunpack.c.l.b16 %v164
  %v210 = vunpack.c.l.b16 %v165
  %v211 = vpack.c.b16 %v208, %v207
  %v212 = vpack.c.b16 %v210, %v209
  %v216 = vsel %vm195, %v202, 0
  %218 = vmatprep.subr.bf16.mxu0 0
  %219 = vmatpush1.bf16.msra.mxu0 %v211
  %220 = vmatprep.subr.bf16.mxu0 0
  %221 = vmatpush1.bf16.msra.mxu0 %v212
  %222 = vmatprep.subr.bf16.mxu0 0
  %223 = vmatpush1.bf16.msra.mxu0 0
  %224 = vmatprep.subr.bf16.mxu0 0
  %225 = vmatpush1.bf16.msra.mxu0 0
  %226 = vmatprep.subr.bf16.mxu0 0
  %227 = vmatpush1.bf16.msra.mxu0 0
  %228 = vmatprep.subr.bf16.mxu0 0
  %229 = vmatpush1.bf16.msra.mxu0 0
  %230 = vmatprep.subr.bf16.mxu0 0
  %231 = vmatpush1.bf16.msra.mxu0 0
  %232 = vmatprep.subr.bf16.mxu0 0
  %233 = vmatpush1.bf16.msra.mxu0 0
  %234 = vmatprep.subr.bf16.mxu0 0
  %235 = vmatpush1.bf16.msra.mxu0 0
  %236 = vmatprep.subr.bf16.mxu0 0
  %237 = vmatpush1.bf16.msra.mxu0 0
  %238 = vmatprep.subr.bf16.mxu0 0
  %239 = vmatpush1.bf16.msra.mxu0 0
  %240 = vmatprep.subr.bf16.mxu0 0
  %241 = vmatpush1.bf16.msra.mxu0 0
  %242 = vmatprep.subr.bf16.mxu0 0
  %243 = vmatpush1.bf16.msra.mxu0 0
  %244 = vmatprep.subr.bf16.mxu0 0
  %245 = vmatpush1.bf16.msra.mxu0 0
  %246 = vmatprep.subr.bf16.mxu0 0
  %247 = vmatpush1.bf16.msra.mxu0 0
  %248 = vmatprep.subr.bf16.mxu0 0
  %249 = vmatpush1.bf16.msra.mxu0 0
  %250 = vmatprep.mubr.bf16.mxu0 0
  %251 = vmatmul.mubr.bf16.gmra.mrb[0].mxu0 %v216
  %v252 = vpop.f32.mrb[0].mxu0
  %v253 = vadd.f32 0.0, %v252
  %v254 = vpop.f32.mrb[0].mxu0
  %v255 = vpop.f32.mrb[0].mxu0
  %v256 = vpop.f32.mrb[0].mxu0
  %257 = vdwg.mxu0
  %v258 = vadd.f32 %v198, %v253
  %v259 = vxor.u32 %v258, 2147483648
  %v260 = vmul.f32 %v259, 1.442695
  %v261 = vpow.pop %v260
  %v262 = vadd.f32 %v261, 1.0
  %v263 = vrcp.pop %v262
  %v264 = vmul.f32 1.0, %v263
  %v265 = vtanh.pop %v258
  %v266 = vmul.f32 %v264, %v184
  %268 = vrot.lane.b32.xlu0 %v265, 64
  %v269 = vpop.permute.xlu0 %268
  %v271 = vmul.f32 %v264, %v269
  %273 = vrot.lane.b32.xlu0 %v271, 32
  %v274 = vpop.permute.xlu0 %273
  %v276 = vadd.f32 %v266, %v274
  %v277 = vtanh.pop %v276
  %279 = vrot.lane.b32.xlu0 %v277, 64
  %v280 = vpop.permute.xlu0 %279
  %v282 = vmul.f32 %v264, %v280
  %284 = vrot.lane.b32.xlu0 %v282, 32
  %v285 = vpop.permute.xlu0 %284
  %s287 = scalar_lea.vmem [#allocation3], 8
  %288 = vst.msk [vmem:[%s287] sm:$0xff] %vm195, %v285
  %s289 = scalar_lea.vmem [#allocation2], 16
  %v290 = vld [vmem:[%s289] sm:$0xff]
  %v291 = vpack.c.bf16 %v282, %v282
  %293 = vrot.lane.b32.xlu0 %v291, 32
  %v294 = vpop.permute.xlu0 %293
  %v296 = vsel %vm195, %v294, 0
  %298 = vmatprep.subr.bf16.mxu0 0
  %299 = vmatpush1.bf16.msra.mxu0 %v211
  %300 = vmatprep.subr.bf16.mxu0 0
  %301 = vmatpush1.bf16.msra.mxu0 %v212
  %302 = vmatprep.subr.bf16.mxu0 0
  %303 = vmatpush1.bf16.msra.mxu0 0
  %304 = vmatprep.subr.bf16.mxu0 0
  %305 = vmatpush1.bf16.msra.mxu0 0
  %306 = vmatprep.subr.bf16.mxu0 0
  %307 = vmatpush1.bf16.msra.mxu0 0
  %308 = vmatprep.subr.bf16.mxu0 0
  %309 = vmatpush1.bf16.msra.mxu0 0
  %310 = vmatprep.subr.bf16.mxu0 0
  %311 = vmatpush1.bf16.msra.mxu0 0
  %312 = vmatprep.subr.bf16.mxu0 0
  %313 = vmatpush1.bf16.msra.mxu0 0
  %314 = vmatprep.subr.bf16.mxu0 0
  %315 = vmatpush1.bf16.msra.mxu0 0
  %316 = vmatprep.subr.bf16.mxu0 0
  %317 = vmatpush1.bf16.msra.mxu0 0
  %318 = vmatprep.subr.bf16.mxu0 0
  %319 = vmatpush1.bf16.msra.mxu0 0
  %320 = vmatprep.subr.bf16.mxu0 0
  %321 = vmatpush1.bf16.msra.mxu0 0
  %322 = vmatprep.subr.bf16.mxu0 0
  %323 = vmatpush1.bf16.msra.mxu0 0
  %324 = vmatprep.subr.bf16.mxu0 0
  %325 = vmatpush1.bf16.msra.mxu0 0
  %326 = vmatprep.subr.bf16.mxu0 0
  %327 = vmatpush1.bf16.msra.mxu0 0
  %328 = vmatprep.subr.bf16.mxu0 0
  %329 = vmatpush1.bf16.msra.mxu0 0
  %330 = vmatprep.mubr.bf16.mxu0 0
  %331 = vmatmul.mubr.bf16.gmra.mrb[0].mxu0 %v296
  %v332 = vpop.f32.mrb[0].mxu0
  %v333 = vadd.f32 0.0, %v332
  %v334 = vpop.f32.mrb[0].mxu0
  %v335 = vpop.f32.mrb[0].mxu0
  %v336 = vpop.f32.mrb[0].mxu0
  %337 = vdwg.mxu0
  %v338 = vadd.f32 %v290, %v333
  %v339 = vxor.u32 %v338, 2147483648
  %v340 = vmul.f32 %v339, 1.442695
  %v341 = vpow.pop %v340
  %v342 = vadd.f32 %v341, 1.0
  %v343 = vrcp.pop %v342
  %v344 = vmul.f32 1.0, %v343
  %v345 = vtanh.pop %v338
  %v346 = vmul.f32 %v344, %v276
  %348 = vrot.lane.b32.xlu0 %v345, 64
  %v349 = vpop.permute.xlu0 %348
  %v351 = vmul.f32 %v344, %v349
  %353 = vrot.lane.b32.xlu0 %v351, 32
  %v354 = vpop.permute.xlu0 %353
  %v356 = vadd.f32 %v346, %v354
  %v357 = vtanh.pop %v356
  %359 = vrot.lane.b32.xlu0 %v357, 64
  %v360 = vpop.permute.xlu0 %359
  %v362 = vmul.f32 %v344, %v360
  %364 = vrot.lane.b32.xlu0 %v362, 32
  %v365 = vpop.permute.xlu0 %364
  %s367 = scalar_lea.vmem [#allocation3], 16
  %368 = vst.msk [vmem:[%s367] sm:$0xff] %vm195, %v365
  %s369 = scalar_lea.vmem [#allocation2], 24
  %v370 = vld [vmem:[%s369] sm:$0xff]
  %v371 = vpack.c.bf16 %v362, %v362
  %373 = vrot.lane.b32.xlu0 %v371, 32
  %v374 = vpop.permute.xlu0 %373
  %v376 = vsel %vm195, %v374, 0
  %378 = vmatprep.subr.bf16.mxu0 0
  %379 = vmatpush1.bf16.msra.mxu0 %v211
  %380 = vmatprep.subr.bf16.mxu0 0
  %381 = vmatpush1.bf16.msra.mxu0 %v212
  %382 = vmatprep.subr.bf16.mxu0 0
  %383 = vmatpush1.bf16.msra.mxu0 0
  %384 = vmatprep.subr.bf16.mxu0 0
  %385 = vmatpush1.bf16.msra.mxu0 0
  %386 = vmatprep.subr.bf16.mxu0 0
  %387 = vmatpush1.bf16.msra.mxu0 0
  %388 = vmatprep.subr.bf16.mxu0 0
  %389 = vmatpush1.bf16.msra.mxu0 0
  %390 = vmatprep.subr.bf16.mxu0 0
  %391 = vmatpush1.bf16.msra.mxu0 0
  %392 = vmatprep.subr.bf16.mxu0 0
  %393 = vmatpush1.bf16.msra.mxu0 0
  %394 = vmatprep.subr.bf16.mxu0 0
  %395 = vmatpush1.bf16.msra.mxu0 0
  %396 = vmatprep.subr.bf16.mxu0 0
  %397 = vmatpush1.bf16.msra.mxu0 0
  %398 = vmatprep.subr.bf16.mxu0 0
  %399 = vmatpush1.bf16.msra.mxu0 0
  %400 = vmatprep.subr.bf16.mxu0 0
  %401 = vmatpush1.bf16.msra.mxu0 0
  %402 = vmatprep.subr.bf16.mxu0 0
  %403 = vmatpush1.bf16.msra.mxu0 0
  %404 = vmatprep.subr.bf16.mxu0 0
  %405 = vmatpush1.bf16.msra.mxu0 0
  %406 = vmatprep.subr.bf16.mxu0 0
  %407 = vmatpush1.bf16.msra.mxu0 0
  %408 = vmatprep.subr.bf16.mxu0 0
  %409 = vmatpush1.bf16.msra.mxu0 0
  %410 = vmatprep.mubr.bf16.mxu0 0
  %411 = vmatmul.mubr.bf16.gmra.mrb[0].mxu0 %v376
  %v412 = vpop.f32.mrb[0].mxu0
  %v413 = vadd.f32 0.0, %v412
  %v414 = vpop.f32.mrb[0].mxu0
  %v415 = vpop.f32.mrb[0].mxu0
  %v416 = vpop.f32.mrb[0].mxu0
  %417 = vdwg.mxu0
  %v418 = vadd.f32 %v370, %v413
  %v419 = vxor.u32 %v418, 2147483648
  %v420 = vmul.f32 %v419, 1.442695
  %v421 = vpow.pop %v420
  %v422 = vadd.f32 %v421, 1.0
  %v423 = vrcp.pop %v422
  %v424 = vmul.f32 1.0, %v423
  %v425 = vtanh.pop %v418
  %v426 = vmul.f32 %v424, %v356
  %428 = vrot.lane.b32.xlu0 %v425, 64
  %v429 = vpop.permute.xlu0 %428
  %v431 = vmul.f32 %v424, %v429
  %433 = vrot.lane.b32.xlu0 %v431, 32
  %v434 = vpop.permute.xlu0 %433
  %v436 = vadd.f32 %v426, %v434
  %v437 = vtanh.pop %v436
  %439 = vrot.lane.b32.xlu0 %v437, 64
  %v440 = vpop.permute.xlu0 %439
  %v442 = vmul.f32 %v424, %v440
  %444 = vrot.lane.b32.xlu0 %v442, 32
  %v445 = vpop.permute.xlu0 %444
  %s447 = scalar_lea.vmem [#allocation3], 24
  %448 = vst.msk [vmem:[%s447] sm:$0xff] %vm195, %v445
  %s449 = scalar_lea.vmem [#allocation2], 32
  %v450 = vld [vmem:[%s449] sm:$0xff]
  %v451 = vpack.c.bf16 %v442, %v442
  %453 = vrot.lane.b32.xlu0 %v451, 32
  %v454 = vpop.permute.xlu0 %453
  %v456 = vsel %vm195, %v454, 0
  %458 = vmatprep.subr.bf16.mxu0 0
  %459 = vmatpush1.bf16.msra.mxu0 %v211
  %460 = vmatprep.subr.bf16.mxu0 0
  %461 = vmatpush1.bf16.msra.mxu0 %v212
  %462 = vmatprep.subr.bf16.mxu0 0
  %463 = vmatpush1.bf16.msra.mxu0 0
  %464 = vmatprep.subr.bf16.mxu0 0
  %465 = vmatpush1.bf16.msra.mxu0 0
  %466 = vmatprep.subr.bf16.mxu0 0
  %467 = vmatpush1.bf16.msra.mxu0 0
  %468 = vmatprep.subr.bf16.mxu0 0
  %469 = vmatpush1.bf16.msra.mxu0 0
  %470 = vmatprep.subr.bf16.mxu0 0
  %471 = vmatpush1.bf16.msra.mxu0 0
  %472 = vmatprep.subr.bf16.mxu0 0
  %473 = vmatpush1.bf16.msra.mxu0 0
  %474 = vmatprep.subr.bf16.mxu0 0
  %475 = vmatpush1.bf16.msra.mxu0 0
  %476 = vmatprep.subr.bf16.mxu0 0
  %477 = vmatpush1.bf16.msra.mxu0 0
  %478 = vmatprep.subr.bf16.mxu0 0
  %479 = vmatpush1.bf16.msra.mxu0 0
  %480 = vmatprep.subr.bf16.mxu0 0
  %481 = vmatpush1.bf16.msra.mxu0 0
  %482 = vmatprep.subr.bf16.mxu0 0
  %483 = vmatpush1.bf16.msra.mxu0 0
  %484 = vmatprep.subr.bf16.mxu0 0
  %485 = vmatpush1.bf16.msra.mxu0 0
  %486 = vmatprep.subr.bf16.mxu0 0
  %487 = vmatpush1.bf16.msra.mxu0 0
  %488 = vmatprep.subr.bf16.mxu0 0
  %489 = vmatpush1.bf16.msra.mxu0 0
  %490 = vmatprep.mubr.bf16.mxu0 0
  %491 = vmatmul.mubr.bf16.gmra.mrb[0].mxu0 %v456
  %v492 = vpop.f32.mrb[0].mxu0
  %v493 = vadd.f32 0.0, %v492
  %v494 = vpop.f32.mrb[0].mxu0
  %v495 = vpop.f32.mrb[0].mxu0
  %v496 = vpop.f32.mrb[0].mxu0
  %497 = vdwg.mxu0
  %v498 = vadd.f32 %v450, %v493
  %v499 = vxor.u32 %v498, 2147483648
  %v500 = vmul.f32 %v499, 1.442695
  %v501 = vpow.pop %v500
  %v502 = vadd.f32 %v501, 1.0
  %v503 = vrcp.pop %v502
  %v504 = vmul.f32 1.0, %v503
  %v505 = vtanh.pop %v498
  %v506 = vmul.f32 %v504, %v436
  %508 = vrot.lane.b32.xlu0 %v505, 64
  %v509 = vpop.permute.xlu0 %508
  %v511 = vmul.f32 %v504, %v509
  %513 = vrot.lane.b32.xlu0 %v511, 32
  %v514 = vpop.permute.xlu0 %513
  %v516 = vadd.f32 %v506, %v514
  %v517 = vtanh.pop %v516
  %519 = vrot.lane.b32.xlu0 %v517, 64
  %v520 = vpop.permute.xlu0 %519
  %v522 = vmul.f32 %v504, %v520
  %524 = vrot.lane.b32.xlu0 %v522, 32
  %v525 = vpop.permute.xlu0 %524
  %s527 = scalar_lea.vmem [#allocation3], 32
  %528 = vst.msk [vmem:[%s527] sm:$0xff] %vm195, %v525
  %s529 = scalar_lea.vmem [#allocation2], 40
  %v530 = vld [vmem:[%s529] sm:$0xff]
  %v531 = vpack.c.bf16 %v522, %v522
  %533 = vrot.lane.b32.xlu0 %v531, 32
  %v534 = vpop.permute.xlu0 %533
  %v536 = vsel %vm195, %v534, 0
  %538 = vmatprep.subr.bf16.mxu0 0
  %539 = vmatpush1.bf16.msra.mxu0 %v211
  %540 = vmatprep.subr.bf16.mxu0 0
  %541 = vmatpush1.bf16.msra.mxu0 %v212
  %542 = vmatprep.subr.bf16.mxu0 0
  %543 = vmatpush1.bf16.msra.mxu0 0
  %544 = vmatprep.subr.bf16.mxu0 0
  %545 = vmatpush1.bf16.msra.mxu0 0
  %546 = vmatprep.subr.bf16.mxu0 0
  %547 = vmatpush1.bf16.msra.mxu0 0
  %548 = vmatprep.subr.bf16.mxu0 0
  %549 = vmatpush1.bf16.msra.mxu0 0
  %550 = vmatprep.subr.bf16.mxu0 0
  %551 = vmatpush1.bf16.msra.mxu0 0
  %552 = vmatprep.subr.bf16.mxu0 0
  %553 = vmatpush1.bf16.msra.mxu0 0
  %554 = vmatprep.subr.bf16.mxu0 0
  %555 = vmatpush1.bf16.msra.mxu0 0
  %556 = vmatprep.subr.bf16.mxu0 0
  %557 = vmatpush1.bf16.msra.mxu0 0
  %558 = vmatprep.subr.bf16.mxu0 0
  %559 = vmatpush1.bf16.msra.mxu0 0
  %560 = vmatprep.subr.bf16.mxu0 0
  %561 = vmatpush1.bf16.msra.mxu0 0
  %562 = vmatprep.subr.bf16.mxu0 0
  %563 = vmatpush1.bf16.msra.mxu0 0
  %564 = vmatprep.subr.bf16.mxu0 0
  %565 = vmatpush1.bf16.msra.mxu0 0
  %566 = vmatprep.subr.bf16.mxu0 0
  %567 = vmatpush1.bf16.msra.mxu0 0
  %568 = vmatprep.subr.bf16.mxu0 0
  %569 = vmatpush1.bf16.msra.mxu0 0
  %570 = vmatprep.mubr.bf16.mxu0 0
  %571 = vmatmul.mubr.bf16.gmra.mrb[0].mxu0 %v536
  %v572 = vpop.f32.mrb[0].mxu0
  %v573 = vadd.f32 0.0, %v572
  %v574 = vpop.f32.mrb[0].mxu0
  %v575 = vpop.f32.mrb[0].mxu0
  %v576 = vpop.f32.mrb[0].mxu0
  %577 = vdwg.mxu0
  %v578 = vadd.f32 %v530, %v573
  %v579 = vxor.u32 %v578, 2147483648
  %v580 = vmul.f32 %v579, 1.442695
  %v581 = vpow.pop %v580
  %v582 = vadd.f32 %v581, 1.0
  %v583 = vrcp.pop %v582
  %v584 = vmul.f32 1.0, %v583
  %v585 = vtanh.pop %v578
  %v586 = vmul.f32 %v584, %v516
  %588 = vrot.lane.b32.xlu0 %v585, 64
  %v589 = vpop.permute.xlu0 %588
  %v591 = vmul.f32 %v584, %v589
  %593 = vrot.lane.b32.xlu0 %v591, 32
  %v594 = vpop.permute.xlu0 %593
  %v596 = vadd.f32 %v586, %v594
  %v597 = vtanh.pop %v596
  %599 = vrot.lane.b32.xlu0 %v597, 64
  %v600 = vpop.permute.xlu0 %599
  %v602 = vmul.f32 %v584, %v600
  %604 = vrot.lane.b32.xlu0 %v602, 32
  %v605 = vpop.permute.xlu0 %604
  %s607 = scalar_lea.vmem [#allocation3], 40
  %608 = vst.msk [vmem:[%s607] sm:$0xff] %vm195, %v605
  %s609 = scalar_lea.vmem [#allocation2], 48
  %v610 = vld [vmem:[%s609] sm:$0xff]
  %v611 = vpack.c.bf16 %v602, %v602
  %613 = vrot.lane.b32.xlu0 %v611, 32
  %v614 = vpop.permute.xlu0 %613
  %v616 = vsel %vm195, %v614, 0
  %618 = vmatprep.subr.bf16.mxu0 0
  %619 = vmatpush1.bf16.msra.mxu0 %v211
  %620 = vmatprep.subr.bf16.mxu0 0
  %621 = vmatpush1.bf16.msra.mxu0 %v212
  %622 = vmatprep.subr.bf16.mxu0 0
  %623 = vmatpush1.bf16.msra.mxu0 0
  %624 = vmatprep.subr.bf16.mxu0 0
  %625 = vmatpush1.bf16.msra.mxu0 0
  %626 = vmatprep.subr.bf16.mxu0 0
  %627 = vmatpush1.bf16.msra.mxu0 0
  %628 = vmatprep.subr.bf16.mxu0 0
  %629 = vmatpush1.bf16.msra.mxu0 0
  %630 = vmatprep.subr.bf16.mxu0 0
  %631 = vmatpush1.bf16.msra.mxu0 0
  %632 = vmatprep.subr.bf16.mxu0 0
  %633 = vmatpush1.bf16.msra.mxu0 0
  %634 = vmatprep.subr.bf16.mxu0 0
  %635 = vmatpush1.bf16.msra.mxu0 0
  %636 = vmatprep.subr.bf16.mxu0 0
  %637 = vmatpush1.bf16.msra.mxu0 0
  %638 = vmatprep.subr.bf16.mxu0 0
  %639 = vmatpush1.bf16.msra.mxu0 0
  %640 = vmatprep.subr.bf16.mxu0 0
  %641 = vmatpush1.bf16.msra.mxu0 0
  %642 = vmatprep.subr.bf16.mxu0 0
  %643 = vmatpush1.bf16.msra.mxu0 0
  %644 = vmatprep.subr.bf16.mxu0 0
  %645 = vmatpush1.bf16.msra.mxu0 0
  %646 = vmatprep.subr.bf16.mxu0 0
  %647 = vmatpush1.bf16.msra.mxu0 0
  %648 = vmatprep.subr.bf16.mxu0 0
  %649 = vmatpush1.bf16.msra.mxu0 0
  %650 = vmatprep.mubr.bf16.mxu0 0
  %651 = vmatmul.mubr.bf16.gmra.mrb[0].mxu0 %v616
  %v652 = vpop.f32.mrb[0].mxu0
  %v653 = vadd.f32 0.0, %v652
  %v654 = vpop.f32.mrb[0].mxu0
  %v655 = vpop.f32.mrb[0].mxu0
  %v656 = vpop.f32.mrb[0].mxu0
  %657 = vdwg.mxu0
  %v658 = vadd.f32 %v610, %v653
  %v659 = vxor.u32 %v658, 2147483648
  %v660 = vmul.f32 %v659, 1.442695
  %v661 = vpow.pop %v660
  %v662 = vadd.f32 %v661, 1.0
  %v663 = vrcp.pop %v662
  %v664 = vmul.f32 1.0, %v663
  %v665 = vtanh.pop %v658
  %v666 = vmul.f32 %v664, %v596
  %668 = vrot.lane.b32.xlu0 %v665, 64
  %v669 = vpop.permute.xlu0 %668
  %v671 = vmul.f32 %v664, %v669
  %673 = vrot.lane.b32.xlu0 %v671, 32
  %v674 = vpop.permute.xlu0 %673
  %v676 = vadd.f32 %v666, %v674
  %v677 = vtanh.pop %v676
  %679 = vrot.lane.b32.xlu0 %v677, 64
  %v680 = vpop.permute.xlu0 %679
  %v682 = vmul.f32 %v664, %v680
  %684 = vrot.lane.b32.xlu0 %v682, 32
  %v685 = vpop.permute.xlu0 %684
  %s687 = scalar_lea.vmem [#allocation3], 48
  %688 = vst.msk [vmem:[%s687] sm:$0xff] %vm195, %v685
  %s689 = scalar_lea.vmem [#allocation2], 56
  %v690 = vld [vmem:[%s689] sm:$0xff]
  %v691 = vpack.c.bf16 %v682, %v682
  %693 = vrot.lane.b32.xlu0 %v691, 32
  %v694 = vpop.permute.xlu0 %693
  %v696 = vsel %vm195, %v694, 0
  %698 = vmatprep.subr.bf16.mxu0 0
  %699 = vmatpush1.bf16.msra.mxu0 %v211
  %700 = vmatprep.subr.bf16.mxu0 0
  %701 = vmatpush1.bf16.msra.mxu0 %v212
  %702 = vmatprep.subr.bf16.mxu0 0
  %703 = vmatpush1.bf16.msra.mxu0 0
  %704 = vmatprep.subr.bf16.mxu0 0
  %705 = vmatpush1.bf16.msra.mxu0 0
  %706 = vmatprep.subr.bf16.mxu0 0
  %707 = vmatpush1.bf16.msra.mxu0 0
  %708 = vmatprep.subr.bf16.mxu0 0
  %709 = vmatpush1.bf16.msra.mxu0 0
  %710 = vmatprep.subr.bf16.mxu0 0
  %711 = vmatpush1.bf16.msra.mxu0 0
  %712 = vmatprep.subr.bf16.mxu0 0
  %713 = vmatpush1.bf16.msra.mxu0 0
  %714 = vmatprep.subr.bf16.mxu0 0
  %715 = vmatpush1.bf16.msra.mxu0 0
  %716 = vmatprep.subr.bf16.mxu0 0
  %717 = vmatpush1.bf16.msra.mxu0 0
  %718 = vmatprep.subr.bf16.mxu0 0
  %719 = vmatpush1.bf16.msra.mxu0 0
  %720 = vmatprep.subr.bf16.mxu0 0
  %721 = vmatpush1.bf16.msra.mxu0 0
  %722 = vmatprep.subr.bf16.mxu0 0
  %723 = vmatpush1.bf16.msra.mxu0 0
  %724 = vmatprep.subr.bf16.mxu0 0
  %725 = vmatpush1.bf16.msra.mxu0 0
  %726 = vmatprep.subr.bf16.mxu0 0
  %727 = vmatpush1.bf16.msra.mxu0 0
  %728 = vmatprep.subr.bf16.mxu0 0
  %729 = vmatpush1.bf16.msra.mxu0 0
  %730 = vmatprep.mubr.bf16.mxu0 0
  %731 = vmatmul.mubr.bf16.gmra.mrb[0].mxu0 %v696
  %v732 = vpop.f32.mrb[0].mxu0
  %v733 = vadd.f32 0.0, %v732
  %v734 = vpop.f32.mrb[0].mxu0
  %v735 = vpop.f32.mrb[0].mxu0
  %v736 = vpop.f32.mrb[0].mxu0
  %737 = vdwg.mxu0
  %v738 = vadd.f32 %v690, %v733
  %v739 = vxor.u32 %v738, 2147483648
  %v740 = vmul.f32 %v739, 1.442695
  %v741 = vpow.pop %v740
  %v742 = vadd.f32 %v741, 1.0
  %v743 = vrcp.pop %v742
  %v744 = vmul.f32 1.0, %v743
  %v745 = vtanh.pop %v738
  %v746 = vmul.f32 %v744, %v676
  %748 = vrot.lane.b32.xlu0 %v745, 64
  %v749 = vpop.permute.xlu0 %748
  %v751 = vmul.f32 %v744, %v749
  %753 = vrot.lane.b32.xlu0 %v751, 32
  %v754 = vpop.permute.xlu0 %753
  %v756 = vadd.f32 %v746, %v754
  %v757 = vtanh.pop %v756
  %759 = vrot.lane.b32.xlu0 %v757, 64
  %v760 = vpop.permute.xlu0 %759
  %v762 = vmul.f32 %v744, %v760
  %764 = vrot.lane.b32.xlu0 %v762, 32
  %v765 = vpop.permute.xlu0 %764
  %s767 = scalar_lea.vmem [#allocation3], 56
  %768 = vst.msk [vmem:[%s767] sm:$0xff] %vm195, %v765
  %v769 = vld [vmem:[#allocation3] sm:$0xff]
  %v770 = vld [vmem:[#allocation3 + $0x8] sm:$0xff]
  %v771 = vld [vmem:[#allocation3 + $0x10] sm:$0xff]
  %v772 = vld [vmem:[#allocation3 + $0x18] sm:$0xff]
  %v773 = vld [vmem:[#allocation3 + $0x20] sm:$0xff]
  %v774 = vld [vmem:[#allocation3 + $0x28] sm:$0xff]
  %v775 = vld [vmem:[#allocation3 + $0x30] sm:$0xff]
  %v776 = vld [vmem:[#allocation3 + $0x38] sm:$0xff]
  %v777 = vpack.c.bf16 %v770, %v769
  %v778 = vpack.c.bf16 %v772, %v771
  %v779 = vpack.c.bf16 %v774, %v773
  %v780 = vpack.c.bf16 %v776, %v775
  %v781 = vld [vmem:[%s4] sm:$0xf]
  %v782 = vld [vmem:[%s4 + $0x4] sm:$0xf]
  %v783 = vld [vmem:[%s4 + $0x8] sm:$0xf]
  %v784 = vld [vmem:[%s4 + $0xc] sm:$0xf]
  %v785 = vld [vmem:[%s6] sm:$0x1]
  %v787 = vlaneseq
  %v788 = vshrl.u32 %v787, 7
  %v789 = vsub.s32 0, %v788
  %v790 = vrot.slane %v785, %v789
  %v796 = vunpack.c.l.b16 %v781
  %v797 = vunpack.c.l.b16 %v782
  %v798 = vunpack.c.l.b16 %v783
  %v799 = vunpack.c.l.b16 %v784
  %v800 = vpack.c.b16 %v797, %v796
  %v801 = vpack.c.b16 %v799, %v798
  %v805 = vsel %vm195, %v777, 0
  %v808 = vsel %vm195, %v778, 0
  %v811 = vsel %vm195, %v779, 0
  %v814 = vsel %vm195, %v780, 0
  %816 = vmatprep.subr.bf16.mxu0 0
  %817 = vmatpush1.bf16.msra.mxu0 %v800
  %818 = vmatprep.subr.bf16.mxu0 0
  %819 = vmatpush1.bf16.msra.mxu0 %v801
  %820 = vmatprep.subr.bf16.mxu0 0
  %821 = vmatpush1.bf16.msra.mxu0 0
  %822 = vmatprep.subr.bf16.mxu0 0
  %823 = vmatpush1.bf16.msra.mxu0 0
  %824 = vmatprep.subr.bf16.mxu0 0
  %825 = vmatpush1.bf16.msra.mxu0 0
  %826 = vmatprep.subr.bf16.mxu0 0
  %827 = vmatpush1.bf16.msra.mxu0 0
  %828 = vmatprep.subr.bf16.mxu0 0
  %829 = vmatpush1.bf16.msra.mxu0 0
  %830 = vmatprep.subr.bf16.mxu0 0
  %831 = vmatpush1.bf16.msra.mxu0 0
  %832 = vmatprep.subr.bf16.mxu0 0
  %833 = vmatpush1.bf16.msra.mxu0 0
  %834 = vmatprep.subr.bf16.mxu0 0
  %835 = vmatpush1.bf16.msra.mxu0 0
  %836 = vmatprep.subr.bf16.mxu0 0
  %837 = vmatpush1.bf16.msra.mxu0 0
  %838 = vmatprep.subr.bf16.mxu0 0
  %839 = vmatpush1.bf16.msra.mxu0 0
  %840 = vmatprep.subr.bf16.mxu0 0
  %841 = vmatpush1.bf16.msra.mxu0 0
  %842 = vmatprep.subr.bf16.mxu0 0
  %843 = vmatpush1.bf16.msra.mxu0 0
  %844 = vmatprep.subr.bf16.mxu0 0
  %845 = vmatpush1.bf16.msra.mxu0 0
  %846 = vmatprep.subr.bf16.mxu0 0
  %847 = vmatpush1.bf16.msra.mxu0 0
  %848 = vmatprep.mubr.bf16.mxu0 0
  %849 = vmatmul.mubr.bf16.gmra.mrb[0].mxu0 %v805
  %v850 = vpop.f32.mrb[0].mxu0
  %v851 = vadd.f32 %v790, %v850
  %v852 = vpop.f32.mrb[0].mxu0
  %v853 = vpop.f32.mrb[0].mxu0
  %v854 = vadd.f32 %v790, %v853
  %v855 = vpop.f32.mrb[0].mxu0
  %856 = vmatprep.mubr.bf16.mxu0 0
  %857 = vmatmul.mubr.bf16.gmra.mrb[0].mxu0 %v808
  %v858 = vpop.f32.mrb[0].mxu0
  %v859 = vadd.f32 %v790, %v858
  %v860 = vpop.f32.mrb[0].mxu0
  %v861 = vpop.f32.mrb[0].mxu0
  %v862 = vadd.f32 %v790, %v861
  %v863 = vpop.f32.mrb[0].mxu0
  %864 = vmatprep.mubr.bf16.mxu0 0
  %865 = vmatmul.mubr.bf16.gmra.mrb[0].mxu0 %v811
  %v866 = vpop.f32.mrb[0].mxu0
  %v867 = vadd.f32 %v790, %v866
  %v868 = vpop.f32.mrb[0].mxu0
  %v869 = vpop.f32.mrb[0].mxu0
  %v870 = vadd.f32 %v790, %v869
  %v871 = vpop.f32.mrb[0].mxu0
  %872 = vmatprep.mubr.bf16.mxu0 0
  %873 = vmatmul.mubr.bf16.gmra.mrb[0].mxu0 %v814
  %v874 = vpop.f32.mrb[0].mxu0
  %v875 = vadd.f32 %v790, %v874
  %v876 = vpop.f32.mrb[0].mxu0
  %v877 = vpop.f32.mrb[0].mxu0
  %v878 = vadd.f32 %v790, %v877
  %v879 = vpop.f32.mrb[0].mxu0
  %880 = vdwg.mxu0
  %881 = vst [vmem:[#allocation2] sm:$0xff] %v851
  %882 = vst [vmem:[#allocation2 + $0x8] sm:$0xff] %v854
  %883 = vst [vmem:[#allocation2 + $0x10] sm:$0xff] %v859
  %884 = vst [vmem:[#allocation2 + $0x18] sm:$0xff] %v862
  %885 = vst [vmem:[#allocation2 + $0x20] sm:$0xff] %v867
  %886 = vst [vmem:[#allocation2 + $0x28] sm:$0xff] %v870
  %887 = vst [vmem:[#allocation2 + $0x30] sm:$0xff] %v875
  %888 = vst [vmem:[#allocation2 + $0x38] sm:$0xff] %v878
  %v889 = vld [vmem:[%s5] sm:$0xf]
  %v890 = vld [vmem:[%s5 + $0x4] sm:$0xf]
  %v891 = vld [vmem:[%s5 + $0x8] sm:$0xf]
  %v892 = vld [vmem:[%s5 + $0xc] sm:$0xf]
  %v893 = vld [vmem:[#allocation2] sm:$0xff]
  %v894 = vxor.u32 %v893, 2147483648
  %v895 = vmul.f32 %v894, 1.442695
  %v896 = vpow.pop %v895
  %v897 = vadd.f32 %v896, 1.0
  %v898 = vrcp.pop %v897
  %v899 = vmul.f32 1.0, %v898
  %v900 = vtanh.pop %v893
  %v901 = vmul.f32 %v899, 0.0
  %903 = vrot.lane.b32.xlu0 %v900, 64
  %v904 = vpop.permute.xlu0 %903
  %v906 = vmul.f32 %v899, %v904
  %908 = vrot.lane.b32.xlu0 %v906, 32
  %v909 = vpop.permute.xlu0 %908
  %v911 = vadd.f32 %v901, %v909
  %v912 = vtanh.pop %v911
  %914 = vrot.lane.b32.xlu0 %v912, 64
  %v915 = vpop.permute.xlu0 %914
  %v917 = vmul.f32 %v899, %v915
  %v918 = vld [vmem:[%s197] sm:$0xff]
  %v919 = vpack.c.bf16 %v917, %v917
  %921 = vrot.lane.b32.xlu0 %v919, 32
  %v922 = vpop.permute.xlu0 %921
  %v927 = vunpack.c.l.b16 %v889
  %v928 = vunpack.c.l.b16 %v890
  %v929 = vunpack.c.l.b16 %v891
  %v930 = vunpack.c.l.b16 %v892
  %v931 = vpack.c.b16 %v928, %v927
  %v932 = vpack.c.b16 %v930, %v929
  %v936 = vsel %vm195, %v922, 0
  %938 = vmatprep.subr.bf16.mxu0 0
  %939 = vmatpush1.bf16.msra.mxu0 %v931
  %940 = vmatprep.subr.bf16.mxu0 0
  %941 = vmatpush1.bf16.msra.mxu0 %v932
  %942 = vmatprep.subr.bf16.mxu0 0
  %943 = vmatpush1.bf16.msra.mxu0 0
  %944 = vmatprep.subr.bf16.mxu0 0
  %945 = vmatpush1.bf16.msra.mxu0 0
  %946 = vmatprep.subr.bf16.mxu0 0
  %947 = vmatpush1.bf16.msra.mxu0 0
  %948 = vmatprep.subr.bf16.mxu0 0
  %949 = vmatpush1.bf16.msra.mxu0 0
  %950 = vmatprep.subr.bf16.mxu0 0
  %951 = vmatpush1.bf16.msra.mxu0 0
  %952 = vmatprep.subr.bf16.mxu0 0
  %953 = vmatpush1.bf16.msra.mxu0 0
  %954 = vmatprep.subr.bf16.mxu0 0
  %955 = vmatpush1.bf16.msra.mxu0 0
  %956 = vmatprep.subr.bf16.mxu0 0
  %957 = vmatpush1.bf16.msra.mxu0 0
  %958 = vmatprep.subr.bf16.mxu0 0
  %959 = vmatpush1.bf16.msra.mxu0 0
  %960 = vmatprep.subr.bf16.mxu0 0
  %961 = vmatpush1.bf16.msra.mxu0 0
  %962 = vmatprep.subr.bf16.mxu0 0
  %963 = vmatpush1.bf16.msra.mxu0 0
  %964 = vmatprep.subr.bf16.mxu0 0
  %965 = vmatpush1.bf16.msra.mxu0 0
  %966 = vmatprep.subr.bf16.mxu0 0
  %967 = vmatpush1.bf16.msra.mxu0 0
  %968 = vmatprep.subr.bf16.mxu0 0
  %969 = vmatpush1.bf16.msra.mxu0 0
  %970 = vmatprep.mubr.bf16.mxu0 0
  %971 = vmatmul.mubr.bf16.gmra.mrb[0].mxu0 %v936
  %v972 = vpop.f32.mrb[0].mxu0
  %v973 = vadd.f32 0.0, %v972
  %v974 = vpop.f32.mrb[0].mxu0
  %v975 = vpop.f32.mrb[0].mxu0
  %v976 = vpop.f32.mrb[0].mxu0
  %977 = vdwg.mxu0
  %v978 = vadd.f32 %v918, %v973
  %v979 = vxor.u32 %v978, 2147483648
  %v980 = vmul.f32 %v979, 1.442695
  %v981 = vpow.pop %v980
  %v982 = vadd.f32 %v981, 1.0
  %v983 = vrcp.pop %v982
  %v984 = vmul.f32 1.0, %v983
  %v985 = vtanh.pop %v978
  %v986 = vmul.f32 %v984, %v911
  %988 = vrot.lane.b32.xlu0 %v985, 64
  %v989 = vpop.permute.xlu0 %988
  %v991 = vmul.f32 %v984, %v989
  %993 = vrot.lane.b32.xlu0 %v991, 32
  %v994 = vpop.permute.xlu0 %993
  %v996 = vadd.f32 %v986, %v994
  %v997 = vtanh.pop %v996
  %999 = vrot.lane.b32.xlu0 %v997, 64
  %v1000 = vpop.permute.xlu0 %999
  %v1002 = vmul.f32 %v984, %v1000
  %v1003 = vld [vmem:[%s289] sm:$0xff]
  %v1004 = vpack.c.bf16 %v1002, %v1002
  %1006 = vrot.lane.b32.xlu0 %v1004, 32
  %v1007 = vpop.permute.xlu0 %1006
  %v1009 = vsel %vm195, %v1007, 0
  %1011 = vmatprep.subr.bf16.mxu0 0
  %1012 = vmatpush1.bf16.msra.mxu0 %v931
  %1013 = vmatprep.subr.bf16.mxu0 0
  %1014 = vmatpush1.bf16.msra.mxu0 %v932
  %1015 = vmatprep.subr.bf16.mxu0 0
  %1016 = vmatpush1.bf16.msra.mxu0 0
  %1017 = vmatprep.subr.bf16.mxu0 0
  %1018 = vmatpush1.bf16.msra.mxu0 0
  %1019 = vmatprep.subr.bf16.mxu0 0
  %1020 = vmatpush1.bf16.msra.mxu0 0
  %1021 = vmatprep.subr.bf16.mxu0 0
  %1022 = vmatpush1.bf16.msra.mxu0 0
  %1023 = vmatprep.subr.bf16.mxu0 0
  %1024 = vmatpush1.bf16.msra.mxu0 0
  %1025 = vmatprep.subr.bf16.mxu0 0
  %1026 = vmatpush1.bf16.msra.mxu0 0
  %1027 = vmatprep.subr.bf16.mxu0 0
  %1028 = vmatpush1.bf16.msra.mxu0 0
  %1029 = vmatprep.subr.bf16.mxu0 0
  %1030 = vmatpush1.bf16.msra.mxu0 0
  %1031 = vmatprep.subr.bf16.mxu0 0
  %1032 = vmatpush1.bf16.msra.mxu0 0
  %1033 = vmatprep.subr.bf16.mxu0 0
  %1034 = vmatpush1.bf16.msra.mxu0 0
  %1035 = vmatprep.subr.bf16.mxu0 0
  %1036 = vmatpush1.bf16.msra.mxu0 0
  %1037 = vmatprep.subr.bf16.mxu0 0
  %1038 = vmatpush1.bf16.msra.mxu0 0
  %1039 = vmatprep.subr.bf16.mxu0 0
  %1040 = vmatpush1.bf16.msra.mxu0 0
  %1041 = vmatprep.subr.bf16.mxu0 0
  %1042 = vmatpush1.bf16.msra.mxu0 0
  %1043 = vmatprep.mubr.bf16.mxu0 0
  %1044 = vmatmul.mubr.bf16.gmra.mrb[0].mxu0 %v1009
  %v1045 = vpop.f32.mrb[0].mxu0
  %v1046 = vadd.f32 0.0, %v1045
  %v1047 = vpop.f32.mrb[0].mxu0
  %v1048 = vpop.f32.mrb[0].mxu0
  %v1049 = vpop.f32.mrb[0].mxu0
  %1050 = vdwg.mxu0
  %v1051 = vadd.f32 %v1003, %v1046
  %v1052 = vxor.u32 %v1051, 2147483648
  %v1053 = vmul.f32 %v1052, 1.442695
  %v1054 = vpow.pop %v1053
  %v1055 = vadd.f32 %v1054, 1.0
  %v1056 = vrcp.pop %v1055
  %v1057 = vmul.f32 1.0, %v1056
  %v1058 = vtanh.pop %v1051
  %v1059 = vmul.f32 %v1057, %v996
  %1061 = vrot.lane.b32.xlu0 %v1058, 64
  %v1062 = vpop.permute.xlu0 %1061
  %v1064 = vmul.f32 %v1057, %v1062
  %1066 = vrot.lane.b32.xlu0 %v1064, 32
  %v1067 = vpop.permute.xlu0 %1066
  %v1069 = vadd.f32 %v1059, %v1067
  %v1070 = vtanh.pop %v1069
  %1072 = vrot.lane.b32.xlu0 %v1070, 64
  %v1073 = vpop.permute.xlu0 %1072
  %v1075 = vmul.f32 %v1057, %v1073
  %v1076 = vld [vmem:[%s369] sm:$0xff]
  %v1077 = vpack.c.bf16 %v1075, %v1075
  %1079 = vrot.lane.b32.xlu0 %v1077, 32
  %v1080 = vpop.permute.xlu0 %1079
  %v1082 = vsel %vm195, %v1080, 0
  %1084 = vmatprep.subr.bf16.mxu0 0
  %1085 = vmatpush1.bf16.msra.mxu0 %v931
  %1086 = vmatprep.subr.bf16.mxu0 0
  %1087 = vmatpush1.bf16.msra.mxu0 %v932
  %1088 = vmatprep.subr.bf16.mxu0 0
  %1089 = vmatpush1.bf16.msra.mxu0 0
  %1090 = vmatprep.subr.bf16.mxu0 0
  %1091 = vmatpush1.bf16.msra.mxu0 0
  %1092 = vmatprep.subr.bf16.mxu0 0
  %1093 = vmatpush1.bf16.msra.mxu0 0
  %1094 = vmatprep.subr.bf16.mxu0 0
  %1095 = vmatpush1.bf16.msra.mxu0 0
  %1096 = vmatprep.subr.bf16.mxu0 0
  %1097 = vmatpush1.bf16.msra.mxu0 0
  %1098 = vmatprep.subr.bf16.mxu0 0
  %1099 = vmatpush1.bf16.msra.mxu0 0
  %1100 = vmatprep.subr.bf16.mxu0 0
  %1101 = vmatpush1.bf16.msra.mxu0 0
  %1102 = vmatprep.subr.bf16.mxu0 0
  %1103 = vmatpush1.bf16.msra.mxu0 0
  %1104 = vmatprep.subr.bf16.mxu0 0
  %1105 = vmatpush1.bf16.msra.mxu0 0
  %1106 = vmatprep.subr.bf16.mxu0 0
  %1107 = vmatpush1.bf16.msra.mxu0 0
  %1108 = vmatprep.subr.bf16.mxu0 0
  %1109 = vmatpush1.bf16.msra.mxu0 0
  %1110 = vmatprep.subr.bf16.mxu0 0
  %1111 = vmatpush1.bf16.msra.mxu0 0
  %1112 = vmatprep.subr.bf16.mxu0 0
  %1113 = vmatpush1.bf16.msra.mxu0 0
  %1114 = vmatprep.subr.bf16.mxu0 0
  %1115 = vmatpush1.bf16.msra.mxu0 0
  %1116 = vmatprep.mubr.bf16.mxu0 0
  %1117 = vmatmul.mubr.bf16.gmra.mrb[0].mxu0 %v1082
  %v1118 = vpop.f32.mrb[0].mxu0
  %v1119 = vadd.f32 0.0, %v1118
  %v1120 = vpop.f32.mrb[0].mxu0
  %v1121 = vpop.f32.mrb[0].mxu0
  %v1122 = vpop.f32.mrb[0].mxu0
  %1123 = vdwg.mxu0
  %v1124 = vadd.f32 %v1076, %v1119
  %v1125 = vxor.u32 %v1124, 2147483648
  %v1126 = vmul.f32 %v1125, 1.442695
  %v1127 = vpow.pop %v1126
  %v1128 = vadd.f32 %v1127, 1.0
  %v1129 = vrcp.pop %v1128
  %v1130 = vmul.f32 1.0, %v1129
  %v1131 = vtanh.pop %v1124
  %v1132 = vmul.f32 %v1130, %v1069
  %1134 = vrot.lane.b32.xlu0 %v1131, 64
  %v1135 = vpop.permute.xlu0 %1134
  %v1137 = vmul.f32 %v1130, %v1135
  %1139 = vrot.lane.b32.xlu0 %v1137, 32
  %v1140 = vpop.permute.xlu0 %1139
  %v1142 = vadd.f32 %v1132, %v1140
  %v1143 = vtanh.pop %v1142
  %1145 = vrot.lane.b32.xlu0 %v1143, 64
  %v1146 = vpop.permute.xlu0 %1145
  %v1148 = vmul.f32 %v1130, %v1146
  %v1149 = vld [vmem:[%s449] sm:$0xff]
  %v1150 = vpack.c.bf16 %v1148, %v1148
  %1152 = vrot.lane.b32.xlu0 %v1150, 32
  %v1153 = vpop.permute.xlu0 %1152
  %v1155 = vsel %vm195, %v1153, 0
  %1157 = vmatprep.subr.bf16.mxu0 0
  %1158 = vmatpush1.bf16.msra.mxu0 %v931
  %1159 = vmatprep.subr.bf16.mxu0 0
  %1160 = vmatpush1.bf16.msra.mxu0 %v932
  %1161 = vmatprep.subr.bf16.mxu0 0
  %1162 = vmatpush1.bf16.msra.mxu0 0
  %1163 = vmatprep.subr.bf16.mxu0 0
  %1164 = vmatpush1.bf16.msra.mxu0 0
  %1165 = vmatprep.subr.bf16.mxu0 0
  %1166 = vmatpush1.bf16.msra.mxu0 0
  %1167 = vmatprep.subr.bf16.mxu0 0
  %1168 = vmatpush1.bf16.msra.mxu0 0
  %1169 = vmatprep.subr.bf16.mxu0 0
  %1170 = vmatpush1.bf16.msra.mxu0 0
  %1171 = vmatprep.subr.bf16.mxu0 0
  %1172 = vmatpush1.bf16.msra.mxu0 0
  %1173 = vmatprep.subr.bf16.mxu0 0
  %1174 = vmatpush1.bf16.msra.mxu0 0
  %1175 = vmatprep.subr.bf16.mxu0 0
  %1176 = vmatpush1.bf16.msra.mxu0 0
  %1177 = vmatprep.subr.bf16.mxu0 0
  %1178 = vmatpush1.bf16.msra.mxu0 0
  %1179 = vmatprep.subr.bf16.mxu0 0
  %1180 = vmatpush1.bf16.msra.mxu0 0
  %1181 = vmatprep.subr.bf16.mxu0 0
  %1182 = vmatpush1.bf16.msra.mxu0 0
  %1183 = vmatprep.subr.bf16.mxu0 0
  %1184 = vmatpush1.bf16.msra.mxu0 0
  %1185 = vmatprep.subr.bf16.mxu0 0
  %1186 = vmatpush1.bf16.msra.mxu0 0
  %1187 = vmatprep.subr.bf16.mxu0 0
  %1188 = vmatpush1.bf16.msra.mxu0 0
  %1189 = vmatprep.mubr.bf16.mxu0 0
  %1190 = vmatmul.mubr.bf16.gmra.mrb[0].mxu0 %v1155
  %v1191 = vpop.f32.mrb[0].mxu0
  %v1192 = vadd.f32 0.0, %v1191
  %v1193 = vpop.f32.mrb[0].mxu0
  %v1194 = vpop.f32.mrb[0].mxu0
  %v1195 = vpop.f32.mrb[0].mxu0
  %1196 = vdwg.mxu0
  %v1197 = vadd.f32 %v1149, %v1192
  %v1198 = vxor.u32 %v1197, 2147483648
  %v1199 = vmul.f32 %v1198, 1.442695
  %v1200 = vpow.pop %v1199
  %v1201 = vadd.f32 %v1200, 1.0
  %v1202 = vrcp.pop %v1201
  %v1203 = vmul.f32 1.0, %v1202
  %v1204 = vtanh.pop %v1197
  %v1205 = vmul.f32 %v1203, %v1142
  %1207 = vrot.lane.b32.xlu0 %v1204, 64
  %v1208 = vpop.permute.xlu0 %1207
  %v1210 = vmul.f32 %v1203, %v1208
  %1212 = vrot.lane.b32.xlu0 %v1210, 32
  %v1213 = vpop.permute.xlu0 %1212
  %v1215 = vadd.f32 %v1205, %v1213
  %v1216 = vtanh.pop %v1215
  %1218 = vrot.lane.b32.xlu0 %v1216, 64
  %v1219 = vpop.permute.xlu0 %1218
  %v1221 = vmul.f32 %v1203, %v1219
  %v1222 = vld [vmem:[%s529] sm:$0xff]
  %v1223 = vpack.c.bf16 %v1221, %v1221
  %1225 = vrot.lane.b32.xlu0 %v1223, 32
  %v1226 = vpop.permute.xlu0 %1225
  %v1228 = vsel %vm195, %v1226, 0
  %1230 = vmatprep.subr.bf16.mxu0 0
  %1231 = vmatpush1.bf16.msra.mxu0 %v931
  %1232 = vmatprep.subr.bf16.mxu0 0
  %1233 = vmatpush1.bf16.msra.mxu0 %v932
  %1234 = vmatprep.subr.bf16.mxu0 0
  %1235 = vmatpush1.bf16.msra.mxu0 0
  %1236 = vmatprep.subr.bf16.mxu0 0
  %1237 = vmatpush1.bf16.msra.mxu0 0
  %1238 = vmatprep.subr.bf16.mxu0 0
  %1239 = vmatpush1.bf16.msra.mxu0 0
  %1240 = vmatprep.subr.bf16.mxu0 0
  %1241 = vmatpush1.bf16.msra.mxu0 0
  %1242 = vmatprep.subr.bf16.mxu0 0
  %1243 = vmatpush1.bf16.msra.mxu0 0
  %1244 = vmatprep.subr.bf16.mxu0 0
  %1245 = vmatpush1.bf16.msra.mxu0 0
  %1246 = vmatprep.subr.bf16.mxu0 0
  %1247 = vmatpush1.bf16.msra.mxu0 0
  %1248 = vmatprep.subr.bf16.mxu0 0
  %1249 = vmatpush1.bf16.msra.mxu0 0
  %1250 = vmatprep.subr.bf16.mxu0 0
  %1251 = vmatpush1.bf16.msra.mxu0 0
  %1252 = vmatprep.subr.bf16.mxu0 0
  %1253 = vmatpush1.bf16.msra.mxu0 0
  %1254 = vmatprep.subr.bf16.mxu0 0
  %1255 = vmatpush1.bf16.msra.mxu0 0
  %1256 = vmatprep.subr.bf16.mxu0 0
  %1257 = vmatpush1.bf16.msra.mxu0 0
  %1258 = vmatprep.subr.bf16.mxu0 0
  %1259 = vmatpush1.bf16.msra.mxu0 0
  %1260 = vmatprep.subr.bf16.mxu0 0
  %1261 = vmatpush1.bf16.msra.mxu0 0
  %1262 = vmatprep.mubr.bf16.mxu0 0
  %1263 = vmatmul.mubr.bf16.gmra.mrb[0].mxu0 %v1228
  %v1264 = vpop.f32.mrb[0].mxu0
  %v1265 = vadd.f32 0.0, %v1264
  %v1266 = vpop.f32.mrb[0].mxu0
  %v1267 = vpop.f32.mrb[0].mxu0
  %v1268 = vpop.f32.mrb[0].mxu0
  %1269 = vdwg.mxu0
  %v1270 = vadd.f32 %v1222, %v1265
  %v1271 = vxor.u32 %v1270, 2147483648
  %v1272 = vmul.f32 %v1271, 1.442695
  %v1273 = vpow.pop %v1272
  %v1274 = vadd.f32 %v1273, 1.0
  %v1275 = vrcp.pop %v1274
  %v1276 = vmul.f32 1.0, %v1275
  %v1277 = vtanh.pop %v1270
  %v1278 = vmul.f32 %v1276, %v1215
  %1280 = vrot.lane.b32.xlu0 %v1277, 64
  %v1281 = vpop.permute.xlu0 %1280
  %v1283 = vmul.f32 %v1276, %v1281
  %1285 = vrot.lane.b32.xlu0 %v1283, 32
  %v1286 = vpop.permute.xlu0 %1285
  %v1288 = vadd.f32 %v1278, %v1286
  %v1289 = vtanh.pop %v1288
  %1291 = vrot.lane.b32.xlu0 %v1289, 64
  %v1292 = vpop.permute.xlu0 %1291
  %v1294 = vmul.f32 %v1276, %v1292
  %v1295 = vld [vmem:[%s609] sm:$0xff]
  %v1296 = vpack.c.bf16 %v1294, %v1294
  %1298 = vrot.lane.b32.xlu0 %v1296, 32
  %v1299 = vpop.permute.xlu0 %1298
  %v1301 = vsel %vm195, %v1299, 0
  %1303 = vmatprep.subr.bf16.mxu0 0
  %1304 = vmatpush1.bf16.msra.mxu0 %v931
  %1305 = vmatprep.subr.bf16.mxu0 0
  %1306 = vmatpush1.bf16.msra.mxu0 %v932
  %1307 = vmatprep.subr.bf16.mxu0 0
  %1308 = vmatpush1.bf16.msra.mxu0 0
  %1309 = vmatprep.subr.bf16.mxu0 0
  %1310 = vmatpush1.bf16.msra.mxu0 0
  %1311 = vmatprep.subr.bf16.mxu0 0
  %1312 = vmatpush1.bf16.msra.mxu0 0
  %1313 = vmatprep.subr.bf16.mxu0 0
  %1314 = vmatpush1.bf16.msra.mxu0 0
  %1315 = vmatprep.subr.bf16.mxu0 0
  %1316 = vmatpush1.bf16.msra.mxu0 0
  %1317 = vmatprep.subr.bf16.mxu0 0
  %1318 = vmatpush1.bf16.msra.mxu0 0
  %1319 = vmatprep.subr.bf16.mxu0 0
  %1320 = vmatpush1.bf16.msra.mxu0 0
  %1321 = vmatprep.subr.bf16.mxu0 0
  %1322 = vmatpush1.bf16.msra.mxu0 0
  %1323 = vmatprep.subr.bf16.mxu0 0
  %1324 = vmatpush1.bf16.msra.mxu0 0
  %1325 = vmatprep.subr.bf16.mxu0 0
  %1326 = vmatpush1.bf16.msra.mxu0 0
  %1327 = vmatprep.subr.bf16.mxu0 0
  %1328 = vmatpush1.bf16.msra.mxu0 0
  %1329 = vmatprep.subr.bf16.mxu0 0
  %1330 = vmatpush1.bf16.msra.mxu0 0
  %1331 = vmatprep.subr.bf16.mxu0 0
  %1332 = vmatpush1.bf16.msra.mxu0 0
  %1333 = vmatprep.subr.bf16.mxu0 0
  %1334 = vmatpush1.bf16.msra.mxu0 0
  %1335 = vmatprep.mubr.bf16.mxu0 0
  %1336 = vmatmul.mubr.bf16.gmra.mrb[0].mxu0 %v1301
  %v1337 = vpop.f32.mrb[0].mxu0
  %v1338 = vadd.f32 0.0, %v1337
  %v1339 = vpop.f32.mrb[0].mxu0
  %v1340 = vpop.f32.mrb[0].mxu0
  %v1341 = vpop.f32.mrb[0].mxu0
  %1342 = vdwg.mxu0
  %v1343 = vadd.f32 %v1295, %v1338
  %v1344 = vxor.u32 %v1343, 2147483648
  %v1345 = vmul.f32 %v1344, 1.442695
  %v1346 = vpow.pop %v1345
  %v1347 = vadd.f32 %v1346, 1.0
  %v1348 = vrcp.pop %v1347
  %v1349 = vmul.f32 1.0, %v1348
  %v1350 = vtanh.pop %v1343
  %v1351 = vmul.f32 %v1349, %v1288
  %1353 = vrot.lane.b32.xlu0 %v1350, 64
  %v1354 = vpop.permute.xlu0 %1353
  %v1356 = vmul.f32 %v1349, %v1354
  %1358 = vrot.lane.b32.xlu0 %v1356, 32
  %v1359 = vpop.permute.xlu0 %1358
  %v1361 = vadd.f32 %v1351, %v1359
  %v1362 = vtanh.pop %v1361
  %1364 = vrot.lane.b32.xlu0 %v1362, 64
  %v1365 = vpop.permute.xlu0 %1364
  %v1367 = vmul.f32 %v1349, %v1365
  %v1368 = vld [vmem:[%s689] sm:$0xff]
  %v1369 = vpack.c.bf16 %v1367, %v1367
  %1371 = vrot.lane.b32.xlu0 %v1369, 32
  %v1372 = vpop.permute.xlu0 %1371
  %v1374 = vsel %vm195, %v1372, 0
  %1376 = vmatprep.subr.bf16.mxu0 0
  %1377 = vmatpush1.bf16.msra.mxu0 %v931
  %1378 = vmatprep.subr.bf16.mxu0 0
  %1379 = vmatpush1.bf16.msra.mxu0 %v932
  %1380 = vmatprep.subr.bf16.mxu0 0
  %1381 = vmatpush1.bf16.msra.mxu0 0
  %1382 = vmatprep.subr.bf16.mxu0 0
  %1383 = vmatpush1.bf16.msra.mxu0 0
  %1384 = vmatprep.subr.bf16.mxu0 0
  %1385 = vmatpush1.bf16.msra.mxu0 0
  %1386 = vmatprep.subr.bf16.mxu0 0
  %1387 = vmatpush1.bf16.msra.mxu0 0
  %1388 = vmatprep.subr.bf16.mxu0 0
  %1389 = vmatpush1.bf16.msra.mxu0 0
  %1390 = vmatprep.subr.bf16.mxu0 0
  %1391 = vmatpush1.bf16.msra.mxu0 0
  %1392 = vmatprep.subr.bf16.mxu0 0
  %1393 = vmatpush1.bf16.msra.mxu0 0
  %1394 = vmatprep.subr.bf16.mxu0 0
  %1395 = vmatpush1.bf16.msra.mxu0 0
  %1396 = vmatprep.subr.bf16.mxu0 0
  %1397 = vmatpush1.bf16.msra.mxu0 0
  %1398 = vmatprep.subr.bf16.mxu0 0
  %1399 = vmatpush1.bf16.msra.mxu0 0
  %1400 = vmatprep.subr.bf16.mxu0 0
  %1401 = vmatpush1.bf16.msra.mxu0 0
  %1402 = vmatprep.subr.bf16.mxu0 0
  %1403 = vmatpush1.bf16.msra.mxu0 0
  %1404 = vmatprep.subr.bf16.mxu0 0
  %1405 = vmatpush1.bf16.msra.mxu0 0
  %1406 = vmatprep.subr.bf16.mxu0 0
  %1407 = vmatpush1.bf16.msra.mxu0 0
  %1408 = vmatprep.mubr.bf16.mxu0 0
  %1409 = vmatmul.mubr.bf16.gmra.mrb[0].mxu0 %v1374
  %v1410 = vpop.f32.mrb[0].mxu0
  %v1411 = vadd.f32 0.0, %v1410
  %v1412 = vpop.f32.mrb[0].mxu0
  %v1413 = vpop.f32.mrb[0].mxu0
  %v1414 = vpop.f32.mrb[0].mxu0
  %1415 = vdwg.mxu0
  %v1416 = vadd.f32 %v1368, %v1411
  %v1417 = vxor.u32 %v1416, 2147483648
  %v1418 = vmul.f32 %v1417, 1.442695
  %v1419 = vpow.pop %v1418
  %v1420 = vadd.f32 %v1419, 1.0
  %v1421 = vrcp.pop %v1420
  %v1422 = vmul.f32 1.0, %v1421
  %v1423 = vtanh.pop %v1416
  %v1424 = vmul.f32 %v1422, %v1361
  %1426 = vrot.lane.b32.xlu0 %v1423, 64
  %v1427 = vpop.permute.xlu0 %1426
  %v1429 = vmul.f32 %v1422, %v1427
  %1431 = vrot.lane.b32.xlu0 %v1429, 32
  %v1432 = vpop.permute.xlu0 %1431
  %v1434 = vadd.f32 %v1424, %v1432
  %v1435 = vtanh.pop %v1434
  %1437 = vrot.lane.b32.xlu0 %v1435, 64
  %v1438 = vpop.permute.xlu0 %1437
  %v1440 = vmul.f32 %v1422, %v1438
  %v1441 = vld [vmem:[%s7] sm:$0xff]
  %v1442 = vld [vmem:[%s7 + $0x8] sm:$0xff]
  %v1443 = vld [vmem:[%s7 + $0x10] sm:$0xff]
  %v1444 = vld [vmem:[%s7 + $0x18] sm:$0xff]
  %v1445 = vld [vmem:[%s8] sm:$0x1]
  %v1447 = vlaneseq
  %v1448 = vshrl.u32 %v1447, 7
  %v1449 = vsub.s32 0, %v1448
  %v1450 = vrot.slane %v1445, %v1449
  %1453 = vrot.lane.b32.xlu0 %v1440, 32
  %v1454 = vpop.permute.xlu0 %1453
  %v1455 = vsel %vm195, %v1454, 0
  %1457 = vmatprep.subr.mxu0 0.0
  %1458 = vmatpush1.msra.mxu0 %v1441
  %1459 = vmatprep.subr.mxu0 0.0
  %1460 = vmatpush1.msra.mxu0 %v1442
  %1461 = vmatprep.subr.mxu0 0.0
  %1462 = vmatpush1.msra.mxu0 %v1443
  %1463 = vmatprep.subr.mxu0 0.0
  %1464 = vmatpush1.msra.mxu0 %v1444
  %1465 = vmatprep.subr.mxu0 0.0
  %1466 = vmatpush1.msra.mxu0 0.0
  %1467 = vmatprep.subr.mxu0 0.0
  %1468 = vmatpush1.msra.mxu0 0.0
  %1469 = vmatprep.subr.mxu0 0.0
  %1470 = vmatpush1.msra.mxu0 0.0
  %1471 = vmatprep.subr.mxu0 0.0
  %1472 = vmatpush1.msra.mxu0 0.0
  %1473 = vmatprep.subr.mxu0 0.0
  %1474 = vmatpush1.msra.mxu0 0.0
  %1475 = vmatprep.subr.mxu0 0.0
  %1476 = vmatpush1.msra.mxu0 0.0
  %1477 = vmatprep.subr.mxu0 0.0
  %1478 = vmatpush1.msra.mxu0 0.0
  %1479 = vmatprep.subr.mxu0 0.0
  %1480 = vmatpush1.msra.mxu0 0.0
  %1481 = vmatprep.subr.mxu0 0.0
  %1482 = vmatpush1.msra.mxu0 0.0
  %1483 = vmatprep.subr.mxu0 0.0
  %1484 = vmatpush1.msra.mxu0 0.0
  %1485 = vmatprep.subr.mxu0 0.0
  %1486 = vmatpush1.msra.mxu0 0.0
  %1487 = vmatprep.subr.mxu0 0.0
  %1488 = vmatpush1.msra.mxu0 0.0
  %1489 = vmatprep.subr.mxu0 0.0
  %1490 = vmatpush1.msra.mxu0 0.0
  %1491 = vmatprep.subr.mxu0 0.0
  %1492 = vmatpush1.msra.mxu0 0.0
  %1493 = vmatprep.subr.mxu0 0.0
  %1494 = vmatpush1.msra.mxu0 0.0
  %1495 = vmatprep.subr.mxu0 0.0
  %1496 = vmatpush1.msra.mxu0 0.0
  %1497 = vmatprep.subr.mxu0 0.0
  %1498 = vmatpush1.msra.mxu0 0.0
  %1499 = vmatprep.subr.mxu0 0.0
  %1500 = vmatpush1.msra.mxu0 0.0
  %1501 = vmatprep.subr.mxu0 0.0
  %1502 = vmatpush1.msra.mxu0 0.0
  %1503 = vmatprep.subr.mxu0 0.0
  %1504 = vmatpush1.msra.mxu0 0.0
  %1505 = vmatprep.subr.mxu0 0.0
  %1506 = vmatpush1.msra.mxu0 0.0
  %1507 = vmatprep.subr.mxu0 0.0
  %1508 = vmatpush1.msra.mxu0 0.0
  %1509 = vmatprep.subr.mxu0 0.0
  %1510 = vmatpush1.msra.mxu0 0.0
  %1511 = vmatprep.subr.mxu0 0.0
  %1512 = vmatpush1.msra.mxu0 0.0
  %1513 = vmatprep.subr.mxu0 0.0
  %1514 = vmatpush1.msra.mxu0 0.0
  %1515 = vmatprep.subr.mxu0 0.0
  %1516 = vmatpush1.msra.mxu0 0.0
  %1517 = vmatprep.subr.mxu0 0.0
  %1518 = vmatpush1.msra.mxu0 0.0
  %1519 = vmatprep.subr.mxu0 0.0
  %1520 = vmatpush1.msra.mxu0 0.0
  %1521 = vmatprep.mubr.f32.mxu0 0.0
  %1522 = vmatmul.mubr.f32.gmra.mrb[0].mxu0 %v1455
  %v1523 = vpop.f32.mrb[0].mxu0
  %v1524 = vadd.f32 %v1450, %v1523
  %v1525 = vpop.f32.mrb[0].mxu0
  %1526 = vdwg.mxu0
  %v1527 = vxor.u32 %v1524, 2147483648
  %v1528 = vmul.f32 %v1527, 1.442695
  %v1529 = vpow.pop %v1528
  %v1530 = vadd.f32 %v1529, 1.0
  %v1531 = vrcp.pop %v1530
  %v1532 = vmul.f32 1.0, %v1531
  %vm1533 = vcmask 31744
  %1534 = vst.msk [vmem:[%s9] sm:$0xff] %vm1533, %v1532
  // Predicated region
  $region38: #{network_forward.1} parent=0 // pred_check
    _
  $region39: #{network_forward.1} parent=0 // pred_check_branch
    %1536 = sbr.rel (0) target = $region41
  $region40: #{network_forward.1} parent=0 // pred_region
    _
  $region41: #{network_forward.1} parent=0 // pred_fallthru
    _
  // Predicated region
  $region42: #{network_forward.1} parent=0 // pred_check
    _
  $region43: #{network_forward.1} parent=0 // pred_check_branch
    %1538 = sbr.rel (0) target = $region45
  $region44: #{network_forward.1} parent=0 // pred_region
    _
  $region45: #{network_forward.1} parent=0 // pred_fallthru
    _

</llo_original>
